<compile_context>
chip_gen: v7x
topology: tpu7x:2x2x1
jax: 0.10.0
libtpu: 0.0.40
codegen_flags: <defaults>
</compile_context>

<pallas_src>
import jax
import jax.numpy as jnp
from jax.experimental import pallas as pl
from jax.experimental.pallas import tpu as pltpu
import numpy as np

N_FEAT = 2 * 248          # 496, implied by nn.Unflatten(1, (2, 248))
IN_FEAT = N_FEAT + 2      # 498
N_PAD = 512               # hidden width padded up to a multiple of 128
LEAKY_SLOPE = 0.01        # nn.LeakyReLU default
SUBLANE = 16              # row-tile granule (legal for bf16 and f32 tiles)


def _round_up(x, m):
    return (x + m - 1) // m * m


def fc_ff_kernel(x_ref, ct_ref, w1x_ref, w1ct_ref, b1_ref, w2_ref, b2_ref,
                 o_ref):
    # x_ref   : (TB, 496)   cdt   flattened image rows (one batch tile)
    # ct_ref  : (TB, 2)     f32   [c, t] per row
    # w1x_ref : (496, 512)  cdt   W1^T rows for the image features (N padded)
    # w1ct_ref: (2, 512)    f32   W1^T rows for c and t
    # b1_ref  : (1, 512)    f32
    # w2_ref  : (512, 496)  cdt   W2^T, zero-padded on the contraction dim only
    # b2_ref  : (1, 496)    f32
    # o_ref   : (TB, 496)   f32   output tile (lane-dense except last vreg group)
    cdt = w1x_ref.dtype   # MXU compute dtype (bf16 or f32)

    # Layer 1 with the concat fused in:
    #   cat(x, c, t) @ W1^T == x @ W1^T[:496] + c * W1^T[496] + t * W1^T[497]
    h = jnp.dot(x_ref[...].astype(cdt), w1x_ref[...],
                preferred_element_type=jnp.float32)
    ct = ct_ref[...]
    h = (h
         + ct[:, 0:1] * w1ct_ref[0:1, :]
         + ct[:, 1:2] * w1ct_ref[1:2, :]
         + b1_ref[...])
    h = jnp.maximum(h, LEAKY_SLOPE * h)               # LeakyReLU (single VPU op)

    # Layer 2 (padded h columns are exactly zero, so padded W2 rows contribute 0)
    o = jnp.dot(h.astype(cdt), w2_ref[...],
                preferred_element_type=jnp.float32) + b2_ref[...]
    o_ref[...] = o.astype(o_ref.dtype)


def prepare_params(params, compute_dtype=jnp.bfloat16):
    """One-time weight preprocessing: split W1 into image / (c,t) rows, zero-pad
    the hidden dim 496 -> 512, cast the two big matrices to the MXU compute
    dtype (pass jnp.float32 for a bit-tighter f32 path)."""
    w1, b1, w2, b2 = params      # w1:(498,496) b1:(1,496) w2:(496,496) b2:(1,496)
    pad_n = N_PAD - N_FEAT
    w1x = jnp.pad(w1[:N_FEAT, :], ((0, 0), (0, pad_n))).astype(compute_dtype)
    w1ct = jnp.pad(w1[N_FEAT:, :], ((0, 0), (0, pad_n))).astype(jnp.float32)
    b1p = jnp.pad(b1, ((0, 0), (0, pad_n))).astype(jnp.float32)
    w2p = jnp.pad(w2, ((0, pad_n), (0, 0))).astype(compute_dtype)   # rows only
    b2p = b2.astype(jnp.float32)
    return w1x, w1ct, b1p, w2p, b2p


def fc_ff_forward(x, c, t, prepared, *, block_b=1024):
    """x: (B, 2, 248), c: (B, 1), t: (B, 1) -> (B, 2, 248) float32."""
    w1x, w1ct, b1p, w2p, b2p = prepared
    cdt = w1x.dtype
    B = x.shape[0]

    # Stream x in the compute dtype (halves input HBM bytes on the bf16 path);
    # flatten(1) is a free reshape.  c/t stay f32 (tiny).
    x2 = x.reshape(B, N_FEAT).astype(cdt)
    ct = jnp.concatenate([c, t], axis=1).astype(jnp.float32)       # (B, 2)

    # Balanced batch tiling: tiles are equal-sized multiples of the sublane
    # granule, padding waste < one sublane group per tile, and the grid has at
    # least 2 steps when the batch allows it (so both v7x TCs are used).
    num_tiles = max(pl.cdiv(B, block_b), 2 if B >= 2 * SUBLANE else 1)
    tb = _round_up(pl.cdiv(B, num_tiles), SUBLANE)
    b_pad = num_tiles * tb
    if b_pad != B:
        x2 = jnp.pad(x2, ((0, b_pad - B), (0, 0)))
        ct = jnp.pad(ct, ((0, b_pad - B), (0, 0)))

    grid = (num_tiles,)
    flops = 2 * b_pad * (N_FEAT * N_PAD + N_PAD * N_FEAT)
    bytes_accessed = (x2.nbytes + ct.nbytes + w1x.nbytes + w1ct.nbytes
                      + b1p.nbytes + w2p.nbytes + b2p.nbytes
                      + b_pad * N_FEAT * 4)

    out = pl.pallas_call(
        fc_ff_kernel,
        out_shape=jax.ShapeDtypeStruct((b_pad, N_FEAT), jnp.float32),
        grid=grid,
        in_specs=[
            pl.BlockSpec((tb, N_FEAT), lambda i: (i, 0)),      # x tile
            pl.BlockSpec((tb, 2), lambda i: (i, 0)),           # [c, t] tile
            pl.BlockSpec((N_FEAT, N_PAD), lambda i: (0, 0)),   # W1 image rows (resident)
            pl.BlockSpec((2, N_PAD), lambda i: (0, 0)),        # W1 rows for c, t
            pl.BlockSpec((1, N_PAD), lambda i: (0, 0)),        # b1
            pl.BlockSpec((N_PAD, N_FEAT), lambda i: (0, 0)),   # W2 (resident)
            pl.BlockSpec((1, N_FEAT), lambda i: (0, 0)),       # b2
        ],
        out_specs=pl.BlockSpec((tb, N_FEAT), lambda i: (i, 0)),
        compiler_params=pltpu.CompilerParams(
            dimension_semantics=("parallel",)),   # shards across v7x's 2 TCs
        cost_estimate=pl.CostEstimate(
            flops=flops, transcendentals=0, bytes_accessed=bytes_accessed),
    )(x2, ct, w1x, w1ct, b1p, w2p, b2p)

    if b_pad != B:
        out = out[:B]
    return out.reshape(B, 2, 248)   # free reshape; no column slice needed


def init_params(key):
    """PyTorch nn.Linear-style init (uniform +-1/sqrt(fan_in)); weights stored
    transposed as (in_features, out_features)."""
    k1, k2, k3, k4 = jax.random.split(key, 4)
    bound1 = 1.0 / np.sqrt(IN_FEAT)
    bound2 = 1.0 / np.sqrt(N_FEAT)
    w1 = jax.random.uniform(k1, (IN_FEAT, N_FEAT), jnp.float32, -bound1, bound1)
    b1 = jax.random.uniform(k2, (1, N_FEAT), jnp.float32, -bound1, bound1)
    w2 = jax.random.uniform(k3, (N_FEAT, N_FEAT), jnp.float32, -bound2, bound2)
    b2 = jax.random.uniform(k4, (1, N_FEAT), jnp.float32, -bound2, bound2)
    return w1, b1, w2, b2


def _reference(x, c, t, params):
    w1, b1, w2, b2 = params
    B = x.shape[0]
    logits = jnp.concatenate([x.reshape(B, -1), c, t], axis=1)
    h = logits @ w1 + b1
    h = jnp.where(h > 0, h, LEAKY_SLOPE * h)
    return (h @ w2 + b2).reshape(B, 2, 248)


if __name__ == "__main__":
    key = jax.random.PRNGKey(0)
    kx, kc, kt, kp = jax.random.split(key, 4)
    params = init_params(kp)

    prepared_bf16 = prepare_params(params, jnp.bfloat16)   # fast path (all gens)
    prepared_f32 = prepare_params(params, jnp.float32)     # exact path

    # Small demo shape required by the spec.
    B = 2
    x = jax.random.normal(kx, (B, 2, 248), jnp.float32)
    c = jax.random.normal(kc, (B, 1), jnp.float32)
    t = jax.random.normal(kt, (B, 1), jnp.float32)
    ref = _reference(x, c, t, params)

    out_bf16 = jax.block_until_ready(fc_ff_forward(x, c, t, prepared_bf16))
    assert out_bf16.shape == (B, 2, 248)
    np.testing.assert_allclose(np.asarray(out_bf16), np.asarray(ref),
                               rtol=5e-2, atol=5e-2)   # bf16 operands, f32 accum

    out_f32 = jax.block_until_ready(fc_ff_forward(x, c, t, prepared_f32))
    np.testing.assert_allclose(np.asarray(out_f32), np.asarray(ref),
                               rtol=1e-4, atol=1e-4)

    # Exercise the multi-tile grid (>=2 parallel steps) and the batch-padding
    # tail path with balanced tiles.
    B2 = 100
    kx2, kc2, kt2 = jax.random.split(jax.random.PRNGKey(1), 3)
    x2 = jax.random.normal(kx2, (B2, 2, 248), jnp.float32)
    c2 = jax.random.normal(kc2, (B2, 1), jnp.float32)
    t2 = jax.random.normal(kt2, (B2, 1), jnp.float32)
    out2 = jax.block_until_ready(fc_ff_forward(x2, c2, t2, prepared_f32))
    ref2 = _reference(x2, c2, t2, params)
    np.testing.assert_allclose(np.asarray(out2), np.asarray(ref2),
                               rtol=1e-4, atol=1e-4)

    out2_bf16 = jax.block_until_ready(fc_ff_forward(x2, c2, t2, prepared_bf16))
    np.testing.assert_allclose(np.asarray(out2_bf16), np.asarray(ref2),
                               rtol=5e-2, atol=5e-2)

    print("KERNEL_OK")
</pallas_src>

<mosaic_0001>
module attributes {stable_mosaic.version = 11 : i64} {
  func.func @fc_ff_kernel(%arg0: i32, %arg1: memref<16x496xbf16, #tpu.memory_space<vmem>>, %arg2: memref<16x2xf32, #tpu.memory_space<vmem>>, %arg3: memref<496x512xbf16, #tpu.memory_space<vmem>>, %arg4: memref<2x512xf32, #tpu.memory_space<vmem>>, %arg5: memref<1x512xf32, #tpu.memory_space<vmem>>, %arg6: memref<512x496xbf16, #tpu.memory_space<vmem>>, %arg7: memref<1x496xf32, #tpu.memory_space<vmem>>, %arg8: memref<16x496xf32, #tpu.memory_space<vmem>>) attributes {dimension_semantics = [#tpu.dimension_semantics<parallel>], iteration_bounds = array<i64: 1>, scalar_prefetch = 0 : i64, scratch_operands = 0 : i64, tpu.core_type = #tpu.core_type<tc>, window_params = [{transform_indices = @transform_0, window_bounds = array<i64: 16, 496>}, {transform_indices = @transform_1, window_bounds = array<i64: 16, 2>}, {pipeline_mode = #tpu.pipeline_mode<synchronous>, transform_indices = @transform_2, window_bounds = array<i64: 496, 512>}, {pipeline_mode = #tpu.pipeline_mode<synchronous>, transform_indices = @transform_3, window_bounds = array<i64: 2, 512>}, {pipeline_mode = #tpu.pipeline_mode<synchronous>, transform_indices = @transform_4, window_bounds = array<i64: 1, 512>}, {pipeline_mode = #tpu.pipeline_mode<synchronous>, transform_indices = @transform_5, window_bounds = array<i64: 512, 496>}, {pipeline_mode = #tpu.pipeline_mode<synchronous>, transform_indices = @transform_6, window_bounds = array<i64: 1, 496>}, {transform_indices = @transform_7, window_bounds = array<i64: 16, 496>}]} {
    %c0 = arith.constant 0 : index
    %c0_0 = arith.constant 0 : index
    %0 = vector.load %arg1[%c0, %c0_0] : memref<16x496xbf16, #tpu.memory_space<vmem>>, vector<16x496xbf16>
    %c0_1 = arith.constant 0 : index
    %c0_2 = arith.constant 0 : index
    %1 = vector.load %arg3[%c0_1, %c0_2] : memref<496x512xbf16, #tpu.memory_space<vmem>>, vector<496x512xbf16>
    %cst = arith.constant dense<0.000000e+00> : vector<16x512xf32>
    %2 = tpu.matmul %0, %1, %cst {dimension_numbers = #tpu.dot_dimension_numbers<[1], [0], [0], [1], [0, 0, 1, 1], [], []>} : vector<16x496xbf16>, vector<496x512xbf16>, vector<16x512xf32> -> vector<16x512xf32>
    %c0_3 = arith.constant 0 : index
    %c0_4 = arith.constant 0 : index
    %3 = vector.load %arg2[%c0_3, %c0_4] : memref<16x2xf32, #tpu.memory_space<vmem>>, vector<16x2xf32>
    %4 = vector.extract_strided_slice %3 {offsets = [0, 0], sizes = [16, 1], strides = [1, 1]} : vector<16x2xf32> to vector<16x1xf32>
    %c0_5 = arith.constant 0 : index
    %c0_6 = arith.constant 0 : index
    %5 = vector.load %arg4[%c0_5, %c0_6] : memref<2x512xf32, #tpu.memory_space<vmem>>, vector<1x512xf32>
    %6 = vector.broadcast %4 : vector<16x1xf32> to vector<16x512xf32>
    %7 = vector.broadcast %5 : vector<1x512xf32> to vector<16x512xf32>
    %8 = arith.mulf %6, %7 : vector<16x512xf32>
    %9 = arith.addf %2, %8 : vector<16x512xf32>
    %10 = vector.extract_strided_slice %3 {offsets = [0, 1], sizes = [16, 1], strides = [1, 1]} : vector<16x2xf32> to vector<16x1xf32>
    %c1 = arith.constant 1 : index
    %c0_7 = arith.constant 0 : index
    %11 = vector.load %arg4[%c1, %c0_7] : memref<2x512xf32, #tpu.memory_space<vmem>>, vector<1x512xf32>
    %12 = vector.broadcast %10 : vector<16x1xf32> to vector<16x512xf32>
    %13 = vector.broadcast %11 : vector<1x512xf32> to vector<16x512xf32>
    %14 = arith.mulf %12, %13 : vector<16x512xf32>
    %15 = arith.addf %9, %14 : vector<16x512xf32>
    %c0_8 = arith.constant 0 : index
    %c0_9 = arith.constant 0 : index
    %16 = vector.load %arg5[%c0_8, %c0_9] : memref<1x512xf32, #tpu.memory_space<vmem>>, vector<1x512xf32>
    %17 = vector.broadcast %16 : vector<1x512xf32> to vector<16x512xf32>
    %18 = arith.addf %15, %17 : vector<16x512xf32>
    %cst_10 = arith.constant 0.00999999977 : f32
    %19 = vector.broadcast %cst_10 : f32 to vector<16x512xf32>
    %20 = arith.mulf %19, %18 : vector<16x512xf32>
    %21 = arith.maximumf %18, %20 : vector<16x512xf32>
    %22 = arith.truncf %21 : vector<16x512xf32> to vector<16x512xbf16>
    %c0_11 = arith.constant 0 : index
    %c0_12 = arith.constant 0 : index
    %23 = vector.load %arg6[%c0_11, %c0_12] : memref<512x496xbf16, #tpu.memory_space<vmem>>, vector<512x496xbf16>
    %cst_13 = arith.constant dense<0.000000e+00> : vector<16x496xf32>
    %24 = tpu.matmul %22, %23, %cst_13 {dimension_numbers = #tpu.dot_dimension_numbers<[1], [0], [0], [1], [0, 0, 1, 1], [], []>} : vector<16x512xbf16>, vector<512x496xbf16>, vector<16x496xf32> -> vector<16x496xf32>
    %c0_14 = arith.constant 0 : index
    %c0_15 = arith.constant 0 : index
    %25 = vector.load %arg7[%c0_14, %c0_15] : memref<1x496xf32, #tpu.memory_space<vmem>>, vector<1x496xf32>
    %26 = vector.broadcast %25 : vector<1x496xf32> to vector<16x496xf32>
    %27 = arith.addf %24, %26 : vector<16x496xf32>
    %c0_16 = arith.constant 0 : index
    %c0_17 = arith.constant 0 : index
    %28 = vector.load %arg8[%c0_16, %c0_17] : memref<16x496xf32, #tpu.memory_space<vmem>>, vector<16x496xf32>
    tpu.vector_store %arg8[%c0_16, %c0_17], %27 {strides = array<i32>} : memref<16x496xf32, #tpu.memory_space<vmem>>, vector<16x496xf32>,
    return
  }
  func.func @transform_0(%arg0: i32) -> (i32, i32) {
    %c0_i32 = arith.constant 0 : i32
    %c0_i32_0 = arith.constant 0 : i32
    return %arg0, %c0_i32 : i32, i32
  }
  func.func @transform_1(%arg0: i32) -> (i32, i32) {
    %c0_i32 = arith.constant 0 : i32
    %c0_i32_0 = arith.constant 0 : i32
    return %arg0, %c0_i32 : i32, i32
  }
  func.func @transform_2(%arg0: i32) -> (i32, i32) {
    %c0_i32 = arith.constant 0 : i32
    %c0_i32_0 = arith.constant 0 : i32
    %c0_i32_1 = arith.constant 0 : i32
    return %c0_i32, %c0_i32_0 : i32, i32
  }
  func.func @transform_3(%arg0: i32) -> (i32, i32) {
    %c0_i32 = arith.constant 0 : i32
    %c0_i32_0 = arith.constant 0 : i32
    %c0_i32_1 = arith.constant 0 : i32
    return %c0_i32, %c0_i32_0 : i32, i32
  }
  func.func @transform_4(%arg0: i32) -> (i32, i32) {
    %c0_i32 = arith.constant 0 : i32
    %c0_i32_0 = arith.constant 0 : i32
    %c0_i32_1 = arith.constant 0 : i32
    return %c0_i32, %c0_i32_0 : i32, i32
  }
  func.func @transform_5(%arg0: i32) -> (i32, i32) {
    %c0_i32 = arith.constant 0 : i32
    %c0_i32_0 = arith.constant 0 : i32
    %c0_i32_1 = arith.constant 0 : i32
    return %c0_i32, %c0_i32_0 : i32, i32
  }
  func.func @transform_6(%arg0: i32) -> (i32, i32) {
    %c0_i32 = arith.constant 0 : i32
    %c0_i32_0 = arith.constant 0 : i32
    %c0_i32_1 = arith.constant 0 : i32
    return %c0_i32, %c0_i32_0 : i32, i32
  }
  func.func @transform_7(%arg0: i32) -> (i32, i32) {
    %c0_i32 = arith.constant 0 : i32
    %c0_i32_0 = arith.constant 0 : i32
    return %arg0, %c0_i32 : i32, i32
  }
}

</mosaic_0001>

<llo_original>
// kernel: tpu_custom_call.1
$region0: #{tpu_custom_call.1}
  #allocation0 [shape = 'u32[]', space=smem, size = 0x4, offset = 0x4, fixed_abs, tag = 'smem constant byte address 0x4 - core index']
  #allocation1 [shape = 'u32[144,128]{1,0:T(1,128)}', space=vmem, size = 0x12000, scoped, tag = 'internal scratch']
  %s0 = inlined_call_operand.vmem [shape: bf16[16,496], index: 0, kind: input, shape index: {}]
  %s1 = inlined_call_operand.vmem [shape: f32[16,2], index: 1, kind: input, shape index: {}]
  %s2 = inlined_call_operand.vmem [shape: bf16[496,512], index: 2, kind: input, shape index: {}]
  %s3 = inlined_call_operand.vmem [shape: f32[2,512], index: 3, kind: input, shape index: {}]
  %s4 = inlined_call_operand.vmem [shape: f32[1,512], index: 4, kind: input, shape index: {}]
  %s5 = inlined_call_operand.vmem [shape: bf16[512,496], index: 5, kind: input, shape index: {}]
  %s6 = inlined_call_operand.vmem [shape: f32[1,496], index: 6, kind: input, shape index: {}]
  %s7 = inlined_call_operand.hbm [shape: f32[16,496], index: 7, kind: output, shape index: {}]
  %s8 = sld [smem:[#allocation0]]
  $region38: #{tpu_custom_call.1} parent=0
    _
  %s10 = ssub.s32 1, %s8
  %s11 = scalar_select 0, %s10, %s8
  $region1: #{tpu_custom_call.1} parent=0
    #allocation2 [shape = 'u8[32768]{0}', space=vmem, size = 0x8000, scoped, tag = 'output window, operand 0, single buffered']
    #allocation3 [shape = 's32[1]{0}', space=sflag, size = 0x4, scoped, tag = 'scoped memory for tpu_custom_call.1']
    %12 = vsyncpa [#allocation3], 0
    // Predicated region
    $region2: #{tpu_custom_call.1} parent=1 // pred_check
      _
    $region3: #{tpu_custom_call.1} parent=1 // pred_check_branch
      %14 = sbr.rel (0) target = $region5
    $region4: #{tpu_custom_call.1} parent=1 // pred_region
      _
    $region5: #{tpu_custom_call.1} parent=1 // pred_fallthru
      _
    // Predicated region
    $region6: #{tpu_custom_call.1} parent=1 // pred_check
      _
    $region7: #{tpu_custom_call.1} parent=1 // pred_check_branch
      %16 = sbr.rel (0) target = $region9
    $region8: #{tpu_custom_call.1} parent=1 // pred_region
      _
    $region9: #{tpu_custom_call.1} parent=1 // pred_fallthru
      _
    // Predicated region
    $region10: #{tpu_custom_call.1} parent=1 // pred_check
      _
    $region11: #{tpu_custom_call.1} parent=1 // pred_check_branch
      %18 = sbr.rel (0) target = $region13
    $region12: #{tpu_custom_call.1} parent=1 // pred_region
      _
    $region13: #{tpu_custom_call.1} parent=1 // pred_fallthru
      _
    // Predicated region
    $region14: #{tpu_custom_call.1} parent=1 // pred_check
      _
    $region15: #{tpu_custom_call.1} parent=1 // pred_check_branch
      %20 = sbr.rel (0) target = $region17
    $region16: #{tpu_custom_call.1} parent=1 // pred_region
      _
    $region17: #{tpu_custom_call.1} parent=1 // pred_fallthru
      _
    // Predicated region
    $region18: #{tpu_custom_call.1} parent=1 // pred_check
      _
    $region19: #{tpu_custom_call.1} parent=1 // pred_check_branch
      %22 = sbr.rel (0) target = $region21
    $region20: #{tpu_custom_call.1} parent=1 // pred_region
      _
    $region21: #{tpu_custom_call.1} parent=1 // pred_fallthru
      _
    // Predicated region
    $region22: #{tpu_custom_call.1} parent=1 // pred_check
      _
    $region23: #{tpu_custom_call.1} parent=1 // pred_check_branch
      %24 = sbr.rel (0) target = $region25
    $region24: #{tpu_custom_call.1} parent=1 // pred_region
      _
    $region25: #{tpu_custom_call.1} parent=1 // pred_fallthru
      _
    // Predicated region
    $region26: #{tpu_custom_call.1} parent=1 // pred_check
      _
    $region27: #{tpu_custom_call.1} parent=1 // pred_check_branch
      %26 = sbr.rel (0) target = $region29
    $region28: #{tpu_custom_call.1} parent=1 // pred_region
      _
    $region29: #{tpu_custom_call.1} parent=1 // pred_fallthru
      _
    %v28 = vld [vmem:[%s0] sm:$0xff]
    %v29 = vld [vmem:[%s0 + $0x8] sm:$0xff]
    %v30 = vld [vmem:[%s0 + $0x10] sm:$0xff]
    %v31 = vld [vmem:[%s0 + $0x18] sm:$0xff]
    %v32 = vld [vmem:[%s2] sm:$0xff]
    %v33 = vld [vmem:[%s2 + $0x8] sm:$0xff]
    %v34 = vld [vmem:[%s2 + $0x10] sm:$0xff]
    %v35 = vld [vmem:[%s2 + $0x18] sm:$0xff]
    %v36 = vld [vmem:[%s2 + $0x20] sm:$0xff]
    %v37 = vld [vmem:[%s2 + $0x28] sm:$0xff]
    %v38 = vld [vmem:[%s2 + $0x30] sm:$0xff]
    %v39 = vld [vmem:[%s2 + $0x38] sm:$0xff]
    %v40 = vld [vmem:[%s2 + $0x40] sm:$0xff]
    %v41 = vld [vmem:[%s2 + $0x48] sm:$0xff]
    %v42 = vld [vmem:[%s2 + $0x50] sm:$0xff]
    %v43 = vld [vmem:[%s2 + $0x58] sm:$0xff]
    %v44 = vld [vmem:[%s2 + $0x60] sm:$0xff]
    %v45 = vld [vmem:[%s2 + $0x68] sm:$0xff]
    %v46 = vld [vmem:[%s2 + $0x70] sm:$0xff]
    %v47 = vld [vmem:[%s2 + $0x78] sm:$0xff]
    %v48 = vld [vmem:[%s2 + $0x80] sm:$0xff]
    %v49 = vld [vmem:[%s2 + $0x88] sm:$0xff]
    %v50 = vld [vmem:[%s2 + $0x90] sm:$0xff]
    %v51 = vld [vmem:[%s2 + $0x98] sm:$0xff]
    %v52 = vld [vmem:[%s2 + $0xa0] sm:$0xff]
    %v53 = vld [vmem:[%s2 + $0xa8] sm:$0xff]
    %v54 = vld [vmem:[%s2 + $0xb0] sm:$0xff]
    %v55 = vld [vmem:[%s2 + $0xb8] sm:$0xff]
    %v56 = vld [vmem:[%s2 + $0xc0] sm:$0xff]
    %v57 = vld [vmem:[%s2 + $0xc8] sm:$0xff]
    %v58 = vld [vmem:[%s2 + $0xd0] sm:$0xff]
    %v59 = vld [vmem:[%s2 + $0xd8] sm:$0xff]
    %v60 = vld [vmem:[%s2 + $0xe0] sm:$0xff]
    %v61 = vld [vmem:[%s2 + $0xe8] sm:$0xff]
    %v62 = vld [vmem:[%s2 + $0xf0] sm:$0xff]
    %v63 = vld [vmem:[%s2 + $0xf8] sm:$0xff]
    %v64 = vld [vmem:[%s2 + $0x100] sm:$0xff]
    %v65 = vld [vmem:[%s2 + $0x108] sm:$0xff]
    %v66 = vld [vmem:[%s2 + $0x110] sm:$0xff]
    %v67 = vld [vmem:[%s2 + $0x118] sm:$0xff]
    %v68 = vld [vmem:[%s2 + $0x120] sm:$0xff]
    %v69 = vld [vmem:[%s2 + $0x128] sm:$0xff]
    %v70 = vld [vmem:[%s2 + $0x130] sm:$0xff]
    %v71 = vld [vmem:[%s2 + $0x138] sm:$0xff]
    %v72 = vld [vmem:[%s2 + $0x140] sm:$0xff]
    %v73 = vld [vmem:[%s2 + $0x148] sm:$0xff]
    %v74 = vld [vmem:[%s2 + $0x150] sm:$0xff]
    %v75 = vld [vmem:[%s2 + $0x158] sm:$0xff]
    %v76 = vld [vmem:[%s2 + $0x160] sm:$0xff]
    %v77 = vld [vmem:[%s2 + $0x168] sm:$0xff]
    %v78 = vld [vmem:[%s2 + $0x170] sm:$0xff]
    %v79 = vld [vmem:[%s2 + $0x178] sm:$0xff]
    %v80 = vld [vmem:[%s2 + $0x180] sm:$0xff]
    %v81 = vld [vmem:[%s2 + $0x188] sm:$0xff]
    %v82 = vld [vmem:[%s2 + $0x190] sm:$0xff]
    %v83 = vld [vmem:[%s2 + $0x198] sm:$0xff]
    %v84 = vld [vmem:[%s2 + $0x1a0] sm:$0xff]
    %v85 = vld [vmem:[%s2 + $0x1a8] sm:$0xff]
    %v86 = vld [vmem:[%s2 + $0x1b0] sm:$0xff]
    %v87 = vld [vmem:[%s2 + $0x1b8] sm:$0xff]
    %v88 = vld [vmem:[%s2 + $0x1c0] sm:$0xff]
    %v89 = vld [vmem:[%s2 + $0x1c8] sm:$0xff]
    %v90 = vld [vmem:[%s2 + $0x1d0] sm:$0xff]
    %v91 = vld [vmem:[%s2 + $0x1d8] sm:$0xff]
    %v92 = vld [vmem:[%s2 + $0x1e0] sm:$0xff]
    %v93 = vld [vmem:[%s2 + $0x1e8] sm:$0xff]
    %v94 = vld [vmem:[%s2 + $0x1f0] sm:$0xff]
    %v95 = vld [vmem:[%s2 + $0x1f8] sm:$0xff]
    %v96 = vld [vmem:[%s2 + $0x200] sm:$0xff]
    %v97 = vld [vmem:[%s2 + $0x208] sm:$0xff]
    %v98 = vld [vmem:[%s2 + $0x210] sm:$0xff]
    %v99 = vld [vmem:[%s2 + $0x218] sm:$0xff]
    %v100 = vld [vmem:[%s2 + $0x220] sm:$0xff]
    %v101 = vld [vmem:[%s2 + $0x228] sm:$0xff]
    %v102 = vld [vmem:[%s2 + $0x230] sm:$0xff]
    %v103 = vld [vmem:[%s2 + $0x238] sm:$0xff]
    %v104 = vld [vmem:[%s2 + $0x240] sm:$0xff]
    %v105 = vld [vmem:[%s2 + $0x248] sm:$0xff]
    %v106 = vld [vmem:[%s2 + $0x250] sm:$0xff]
    %v107 = vld [vmem:[%s2 + $0x258] sm:$0xff]
    %v108 = vld [vmem:[%s2 + $0x260] sm:$0xff]
    %v109 = vld [vmem:[%s2 + $0x268] sm:$0xff]
    %v110 = vld [vmem:[%s2 + $0x270] sm:$0xff]
    %v111 = vld [vmem:[%s2 + $0x278] sm:$0xff]
    %v112 = vld [vmem:[%s2 + $0x280] sm:$0xff]
    %v113 = vld [vmem:[%s2 + $0x288] sm:$0xff]
    %v114 = vld [vmem:[%s2 + $0x290] sm:$0xff]
    %v115 = vld [vmem:[%s2 + $0x298] sm:$0xff]
    %v116 = vld [vmem:[%s2 + $0x2a0] sm:$0xff]
    %v117 = vld [vmem:[%s2 + $0x2a8] sm:$0xff]
    %v118 = vld [vmem:[%s2 + $0x2b0] sm:$0xff]
    %v119 = vld [vmem:[%s2 + $0x2b8] sm:$0xff]
    %v120 = vld [vmem:[%s2 + $0x2c0] sm:$0xff]
    %v121 = vld [vmem:[%s2 + $0x2c8] sm:$0xff]
    %v122 = vld [vmem:[%s2 + $0x2d0] sm:$0xff]
    %v123 = vld [vmem:[%s2 + $0x2d8] sm:$0xff]
    %v124 = vld [vmem:[%s2 + $0x2e0] sm:$0xff]
    %v125 = vld [vmem:[%s2 + $0x2e8] sm:$0xff]
    %v126 = vld [vmem:[%s2 + $0x2f0] sm:$0xff]
    %v127 = vld [vmem:[%s2 + $0x2f8] sm:$0xff]
    %v128 = vld [vmem:[%s2 + $0x300] sm:$0xff]
    %v129 = vld [vmem:[%s2 + $0x308] sm:$0xff]
    %v130 = vld [vmem:[%s2 + $0x310] sm:$0xff]
    %v131 = vld [vmem:[%s2 + $0x318] sm:$0xff]
    %v132 = vld [vmem:[%s2 + $0x320] sm:$0xff]
    %v133 = vld [vmem:[%s2 + $0x328] sm:$0xff]
    %v134 = vld [vmem:[%s2 + $0x330] sm:$0xff]
    %v135 = vld [vmem:[%s2 + $0x338] sm:$0xff]
    %v136 = vld [vmem:[%s2 + $0x340] sm:$0xff]
    %v137 = vld [vmem:[%s2 + $0x348] sm:$0xff]
    %v138 = vld [vmem:[%s2 + $0x350] sm:$0xff]
    %v139 = vld [vmem:[%s2 + $0x358] sm:$0xff]
    %v140 = vld [vmem:[%s2 + $0x360] sm:$0xff]
    %v141 = vld [vmem:[%s2 + $0x368] sm:$0xff]
    %v142 = vld [vmem:[%s2 + $0x370] sm:$0xff]
    %v143 = vld [vmem:[%s2 + $0x378] sm:$0xff]
    %v144 = vld [vmem:[%s2 + $0x380] sm:$0xff]
    %v145 = vld [vmem:[%s2 + $0x388] sm:$0xff]
    %v146 = vld [vmem:[%s2 + $0x390] sm:$0xff]
    %v147 = vld [vmem:[%s2 + $0x398] sm:$0xff]
    %v148 = vld [vmem:[%s2 + $0x3a0] sm:$0xff]
    %v149 = vld [vmem:[%s2 + $0x3a8] sm:$0xff]
    %v150 = vld [vmem:[%s2 + $0x3b0] sm:$0xff]
    %v151 = vld [vmem:[%s2 + $0x3b8] sm:$0xff]
    %v152 = vld [vmem:[%s2 + $0x3c0] sm:$0xff]
    %v153 = vld [vmem:[%s2 + $0x3c8] sm:$0xff]
    %v154 = vld [vmem:[%s2 + $0x3d0] sm:$0xff]
    %v155 = vld [vmem:[%s2 + $0x3d8] sm:$0xff]
    %v156 = vld [vmem:[%s1] sm:$0xff]
    %v157 = vld [vmem:[%s1 + $0x8] sm:$0xff]
    %v158 = vld [vmem:[%s3] ss:$2 sm:$0xf]
    %160 = vset.pattern.permute.xlu0 0
    %161 = vperm.xlu0 %160, %v156
    %v162 = vpop.permute.xlu0 %161
    %165 = vset.pattern.permute.xlu0 0
    %166 = vperm.xlu0 %165, %v157
    %v167 = vpop.permute.xlu0 %166
    %v170 = vlaneseq
    %v171 = vshrl.u32 %v170, 7
    %v172 = vsub.s32 0, %v171
    %v173 = vrot.slane %v158, %v172
    %v174 = vlaneseq
    %v175 = vshrl.u32 %v174, 7
    %v176 = vsub.s32 1, %v175
    %v177 = vrot.slane %v158, %v176
    %v178 = vlaneseq
    %v179 = vshrl.u32 %v178, 7
    %v180 = vsub.s32 2, %v179
    %v181 = vrot.slane %v158, %v180
    %v182 = vlaneseq
    %v183 = vshrl.u32 %v182, 7
    %v184 = vsub.s32 3, %v183
    %v185 = vrot.slane %v158, %v184
    %v190 = vmul.f32 %v162, %v173
    %v191 = vmul.f32 %v162, %v177
    %v192 = vmul.f32 %v162, %v181
    %v193 = vmul.f32 %v162, %v185
    %v194 = vmul.f32 %v167, %v173
    %v195 = vmul.f32 %v167, %v177
    %v196 = vmul.f32 %v167, %v181
    %v197 = vmul.f32 %v167, %v185
    %v202 = vunpack.c.l.b16 %v28
    %v203 = vunpack.c.h.b16 %v28
    %v204 = vunpack.c.l.b16 %v29
    %v205 = vunpack.c.h.b16 %v29
    %v206 = vunpack.c.l.b16 %v30
    %v207 = vunpack.c.h.b16 %v30
    %v208 = vunpack.c.l.b16 %v31
    %v209 = vunpack.c.h.b16 %v31
    %v210 = vpack.c.b16 %v206, %v202
    %v211 = vpack.c.b16 %v207, %v203
    %v212 = vpack.c.b16 %v208, %v204
    %v213 = vpack.c.b16 %v209, %v205
    %v341 = vunpack.c.l.b16 %v32
    %v342 = vunpack.c.h.b16 %v32
    %v343 = vunpack.c.l.b16 %v33
    %v344 = vunpack.c.h.b16 %v33
    %v345 = vunpack.c.l.b16 %v34
    %v346 = vunpack.c.h.b16 %v34
    %v347 = vunpack.c.l.b16 %v35
    %v348 = vunpack.c.h.b16 %v35
    %v349 = vunpack.c.l.b16 %v36
    %v350 = vunpack.c.h.b16 %v36
    %v351 = vunpack.c.l.b16 %v37
    %v352 = vunpack.c.h.b16 %v37
    %v353 = vunpack.c.l.b16 %v38
    %v354 = vunpack.c.h.b16 %v38
    %v355 = vunpack.c.l.b16 %v39
    %v356 = vunpack.c.h.b16 %v39
    %v357 = vunpack.c.l.b16 %v40
    %v358 = vunpack.c.h.b16 %v40
    %v359 = vunpack.c.l.b16 %v41
    %v360 = vunpack.c.h.b16 %v41
    %v361 = vunpack.c.l.b16 %v42
    %v362 = vunpack.c.h.b16 %v42
    %v363 = vunpack.c.l.b16 %v43
    %v364 = vunpack.c.h.b16 %v43
    %v365 = vunpack.c.l.b16 %v44
    %v366 = vunpack.c.h.b16 %v44
    %v367 = vunpack.c.l.b16 %v45
    %v368 = vunpack.c.h.b16 %v45
    %v369 = vunpack.c.l.b16 %v46
    %v370 = vunpack.c.h.b16 %v46
    %v371 = vunpack.c.l.b16 %v47
    %v372 = vunpack.c.h.b16 %v47
    %v373 = vunpack.c.l.b16 %v48
    %v374 = vunpack.c.h.b16 %v48
    %v375 = vunpack.c.l.b16 %v49
    %v376 = vunpack.c.h.b16 %v49
    %v377 = vunpack.c.l.b16 %v50
    %v378 = vunpack.c.h.b16 %v50
    %v379 = vunpack.c.l.b16 %v51
    %v380 = vunpack.c.h.b16 %v51
    %v381 = vunpack.c.l.b16 %v52
    %v382 = vunpack.c.h.b16 %v52
    %v383 = vunpack.c.l.b16 %v53
    %v384 = vunpack.c.h.b16 %v53
    %v385 = vunpack.c.l.b16 %v54
    %v386 = vunpack.c.h.b16 %v54
    %v387 = vunpack.c.l.b16 %v55
    %v388 = vunpack.c.h.b16 %v55
    %v389 = vunpack.c.l.b16 %v56
    %v390 = vunpack.c.h.b16 %v56
    %v391 = vunpack.c.l.b16 %v57
    %v392 = vunpack.c.h.b16 %v57
    %v393 = vunpack.c.l.b16 %v58
    %v394 = vunpack.c.h.b16 %v58
    %v395 = vunpack.c.l.b16 %v59
    %v396 = vunpack.c.h.b16 %v59
    %v397 = vunpack.c.l.b16 %v60
    %v398 = vunpack.c.h.b16 %v60
    %v399 = vunpack.c.l.b16 %v61
    %v400 = vunpack.c.h.b16 %v61
    %v401 = vunpack.c.l.b16 %v62
    %v402 = vunpack.c.h.b16 %v62
    %v403 = vunpack.c.l.b16 %v63
    %v404 = vunpack.c.h.b16 %v63
    %v405 = vunpack.c.l.b16 %v64
    %v406 = vunpack.c.h.b16 %v64
    %v407 = vunpack.c.l.b16 %v65
    %v408 = vunpack.c.h.b16 %v65
    %v409 = vunpack.c.l.b16 %v66
    %v410 = vunpack.c.h.b16 %v66
    %v411 = vunpack.c.l.b16 %v67
    %v412 = vunpack.c.h.b16 %v67
    %v413 = vunpack.c.l.b16 %v68
    %v414 = vunpack.c.h.b16 %v68
    %v415 = vunpack.c.l.b16 %v69
    %v416 = vunpack.c.h.b16 %v69
    %v417 = vunpack.c.l.b16 %v70
    %v418 = vunpack.c.h.b16 %v70
    %v419 = vunpack.c.l.b16 %v71
    %v420 = vunpack.c.h.b16 %v71
    %v421 = vunpack.c.l.b16 %v72
    %v422 = vunpack.c.h.b16 %v72
    %v423 = vunpack.c.l.b16 %v73
    %v424 = vunpack.c.h.b16 %v73
    %v425 = vunpack.c.l.b16 %v74
    %v426 = vunpack.c.h.b16 %v74
    %v427 = vunpack.c.l.b16 %v75
    %v428 = vunpack.c.h.b16 %v75
    %v429 = vunpack.c.l.b16 %v76
    %v430 = vunpack.c.h.b16 %v76
    %v431 = vunpack.c.l.b16 %v77
    %v432 = vunpack.c.h.b16 %v77
    %v433 = vunpack.c.l.b16 %v78
    %v434 = vunpack.c.h.b16 %v78
    %v435 = vunpack.c.l.b16 %v79
    %v436 = vunpack.c.h.b16 %v79
    %v437 = vunpack.c.l.b16 %v80
    %v438 = vunpack.c.h.b16 %v80
    %v439 = vunpack.c.l.b16 %v81
    %v440 = vunpack.c.h.b16 %v81
    %v441 = vunpack.c.l.b16 %v82
    %v442 = vunpack.c.h.b16 %v82
    %v443 = vunpack.c.l.b16 %v83
    %v444 = vunpack.c.h.b16 %v83
    %v445 = vunpack.c.l.b16 %v84
    %v446 = vunpack.c.h.b16 %v84
    %v447 = vunpack.c.l.b16 %v85
    %v448 = vunpack.c.h.b16 %v85
    %v449 = vunpack.c.l.b16 %v86
    %v450 = vunpack.c.h.b16 %v86
    %v451 = vunpack.c.l.b16 %v87
    %v452 = vunpack.c.h.b16 %v87
    %v453 = vunpack.c.l.b16 %v88
    %v454 = vunpack.c.h.b16 %v88
    %v455 = vunpack.c.l.b16 %v89
    %v456 = vunpack.c.h.b16 %v89
    %v457 = vunpack.c.l.b16 %v90
    %v458 = vunpack.c.h.b16 %v90
    %v459 = vunpack.c.l.b16 %v91
    %v460 = vunpack.c.h.b16 %v91
    %v461 = vunpack.c.l.b16 %v92
    %v462 = vunpack.c.h.b16 %v92
    %v463 = vunpack.c.l.b16 %v93
    %v464 = vunpack.c.h.b16 %v93
    %v465 = vunpack.c.l.b16 %v94
    %v466 = vunpack.c.h.b16 %v94
    %v467 = vunpack.c.l.b16 %v95
    %v468 = vunpack.c.h.b16 %v95
    %v469 = vunpack.c.l.b16 %v96
    %v470 = vunpack.c.h.b16 %v96
    %v471 = vunpack.c.l.b16 %v97
    %v472 = vunpack.c.h.b16 %v97
    %v473 = vunpack.c.l.b16 %v98
    %v474 = vunpack.c.h.b16 %v98
    %v475 = vunpack.c.l.b16 %v99
    %v476 = vunpack.c.h.b16 %v99
    %v477 = vunpack.c.l.b16 %v100
    %v478 = vunpack.c.h.b16 %v100
    %v479 = vunpack.c.l.b16 %v101
    %v480 = vunpack.c.h.b16 %v101
    %v481 = vunpack.c.l.b16 %v102
    %v482 = vunpack.c.h.b16 %v102
    %v483 = vunpack.c.l.b16 %v103
    %v484 = vunpack.c.h.b16 %v103
    %v485 = vunpack.c.l.b16 %v104
    %v486 = vunpack.c.h.b16 %v104
    %v487 = vunpack.c.l.b16 %v105
    %v488 = vunpack.c.h.b16 %v105
    %v489 = vunpack.c.l.b16 %v106
    %v490 = vunpack.c.h.b16 %v106
    %v491 = vunpack.c.l.b16 %v107
    %v492 = vunpack.c.h.b16 %v107
    %v493 = vunpack.c.l.b16 %v108
    %v494 = vunpack.c.h.b16 %v108
    %v495 = vunpack.c.l.b16 %v109
    %v496 = vunpack.c.h.b16 %v109
    %v497 = vunpack.c.l.b16 %v110
    %v498 = vunpack.c.h.b16 %v110
    %v499 = vunpack.c.l.b16 %v111
    %v500 = vunpack.c.h.b16 %v111
    %v501 = vunpack.c.l.b16 %v112
    %v502 = vunpack.c.h.b16 %v112
    %v503 = vunpack.c.l.b16 %v113
    %v504 = vunpack.c.h.b16 %v113
    %v505 = vunpack.c.l.b16 %v114
    %v506 = vunpack.c.h.b16 %v114
    %v507 = vunpack.c.l.b16 %v115
    %v508 = vunpack.c.h.b16 %v115
    %v509 = vunpack.c.l.b16 %v116
    %v510 = vunpack.c.h.b16 %v116
    %v511 = vunpack.c.l.b16 %v117
    %v512 = vunpack.c.h.b16 %v117
    %v513 = vunpack.c.l.b16 %v118
    %v514 = vunpack.c.h.b16 %v118
    %v515 = vunpack.c.l.b16 %v119
    %v516 = vunpack.c.h.b16 %v119
    %v517 = vunpack.c.l.b16 %v120
    %v518 = vunpack.c.h.b16 %v120
    %v519 = vunpack.c.l.b16 %v121
    %v520 = vunpack.c.h.b16 %v121
    %v521 = vunpack.c.l.b16 %v122
    %v522 = vunpack.c.h.b16 %v122
    %v523 = vunpack.c.l.b16 %v123
    %v524 = vunpack.c.h.b16 %v123
    %v525 = vunpack.c.l.b16 %v124
    %v526 = vunpack.c.h.b16 %v124
    %v527 = vunpack.c.l.b16 %v125
    %v528 = vunpack.c.h.b16 %v125
    %v529 = vunpack.c.l.b16 %v126
    %v530 = vunpack.c.h.b16 %v126
    %v531 = vunpack.c.l.b16 %v127
    %v532 = vunpack.c.h.b16 %v127
    %v533 = vunpack.c.l.b16 %v128
    %v534 = vunpack.c.h.b16 %v128
    %v535 = vunpack.c.l.b16 %v129
    %v536 = vunpack.c.h.b16 %v129
    %v537 = vunpack.c.l.b16 %v130
    %v538 = vunpack.c.h.b16 %v130
    %v539 = vunpack.c.l.b16 %v131
    %v540 = vunpack.c.h.b16 %v131
    %v541 = vunpack.c.l.b16 %v132
    %v542 = vunpack.c.h.b16 %v132
    %v543 = vunpack.c.l.b16 %v133
    %v544 = vunpack.c.h.b16 %v133
    %v545 = vunpack.c.l.b16 %v134
    %v546 = vunpack.c.h.b16 %v134
    %v547 = vunpack.c.l.b16 %v135
    %v548 = vunpack.c.h.b16 %v135
    %v549 = vunpack.c.l.b16 %v136
    %v550 = vunpack.c.h.b16 %v136
    %v551 = vunpack.c.l.b16 %v137
    %v552 = vunpack.c.h.b16 %v137
    %v553 = vunpack.c.l.b16 %v138
    %v554 = vunpack.c.h.b16 %v138
    %v555 = vunpack.c.l.b16 %v139
    %v556 = vunpack.c.h.b16 %v139
    %v557 = vunpack.c.l.b16 %v140
    %v558 = vunpack.c.h.b16 %v140
    %v559 = vunpack.c.l.b16 %v141
    %v560 = vunpack.c.h.b16 %v141
    %v561 = vunpack.c.l.b16 %v142
    %v562 = vunpack.c.h.b16 %v142
    %v563 = vunpack.c.l.b16 %v143
    %v564 = vunpack.c.h.b16 %v143
    %v565 = vunpack.c.l.b16 %v144
    %v566 = vunpack.c.h.b16 %v144
    %v567 = vunpack.c.l.b16 %v145
    %v568 = vunpack.c.h.b16 %v145
    %v569 = vunpack.c.l.b16 %v146
    %v570 = vunpack.c.h.b16 %v146
    %v571 = vunpack.c.l.b16 %v147
    %v572 = vunpack.c.h.b16 %v147
    %v573 = vunpack.c.l.b16 %v148
    %v574 = vunpack.c.h.b16 %v148
    %v575 = vunpack.c.l.b16 %v149
    %v576 = vunpack.c.h.b16 %v149
    %v577 = vunpack.c.l.b16 %v150
    %v578 = vunpack.c.h.b16 %v150
    %v579 = vunpack.c.l.b16 %v151
    %v580 = vunpack.c.h.b16 %v151
    %v581 = vunpack.c.l.b16 %v152
    %v582 = vunpack.c.h.b16 %v152
    %v583 = vunpack.c.l.b16 %v153
    %v584 = vunpack.c.h.b16 %v153
    %v585 = vunpack.c.l.b16 %v154
    %v586 = vunpack.c.h.b16 %v154
    %v587 = vunpack.c.l.b16 %v155
    %v588 = vunpack.c.h.b16 %v155
    %v589 = vpack.c.b16 %v345, %v341
    %v590 = vpack.c.b16 %v346, %v342
    %v591 = vpack.c.b16 %v347, %v343
    %v592 = vpack.c.b16 %v348, %v344
    %v593 = vpack.c.b16 %v353, %v349
    %v594 = vpack.c.b16 %v354, %v350
    %v595 = vpack.c.b16 %v355, %v351
    %v596 = vpack.c.b16 %v356, %v352
    %v597 = vpack.c.b16 %v361, %v357
    %v598 = vpack.c.b16 %v362, %v358
    %v599 = vpack.c.b16 %v363, %v359
    %v600 = vpack.c.b16 %v364, %v360
    %v601 = vpack.c.b16 %v369, %v365
    %v602 = vpack.c.b16 %v370, %v366
    %v603 = vpack.c.b16 %v371, %v367
    %v604 = vpack.c.b16 %v372, %v368
    %v605 = vpack.c.b16 %v377, %v373
    %v606 = vpack.c.b16 %v378, %v374
    %v607 = vpack.c.b16 %v379, %v375
    %v608 = vpack.c.b16 %v380, %v376
    %v609 = vpack.c.b16 %v385, %v381
    %v610 = vpack.c.b16 %v386, %v382
    %v611 = vpack.c.b16 %v387, %v383
    %v612 = vpack.c.b16 %v388, %v384
    %v613 = vpack.c.b16 %v393, %v389
    %v614 = vpack.c.b16 %v394, %v390
    %v615 = vpack.c.b16 %v395, %v391
    %v616 = vpack.c.b16 %v396, %v392
    %v617 = vpack.c.b16 %v401, %v397
    %v618 = vpack.c.b16 %v402, %v398
    %v619 = vpack.c.b16 %v403, %v399
    %v620 = vpack.c.b16 %v404, %v400
    %v621 = vpack.c.b16 %v409, %v405
    %v622 = vpack.c.b16 %v410, %v406
    %v623 = vpack.c.b16 %v411, %v407
    %v624 = vpack.c.b16 %v412, %v408
    %v625 = vpack.c.b16 %v417, %v413
    %v626 = vpack.c.b16 %v418, %v414
    %v627 = vpack.c.b16 %v419, %v415
    %v628 = vpack.c.b16 %v420, %v416
    %v629 = vpack.c.b16 %v425, %v421
    %v630 = vpack.c.b16 %v426, %v422
    %v631 = vpack.c.b16 %v427, %v423
    %v632 = vpack.c.b16 %v428, %v424
    %v633 = vpack.c.b16 %v433, %v429
    %v634 = vpack.c.b16 %v434, %v430
    %v635 = vpack.c.b16 %v435, %v431
    %v636 = vpack.c.b16 %v436, %v432
    %v637 = vpack.c.b16 %v441, %v437
    %v638 = vpack.c.b16 %v442, %v438
    %v639 = vpack.c.b16 %v443, %v439
    %v640 = vpack.c.b16 %v444, %v440
    %v641 = vpack.c.b16 %v449, %v445
    %v642 = vpack.c.b16 %v450, %v446
    %v643 = vpack.c.b16 %v451, %v447
    %v644 = vpack.c.b16 %v452, %v448
    %v645 = vpack.c.b16 %v457, %v453
    %v646 = vpack.c.b16 %v458, %v454
    %v647 = vpack.c.b16 %v459, %v455
    %v648 = vpack.c.b16 %v460, %v456
    %v649 = vpack.c.b16 %v465, %v461
    %v650 = vpack.c.b16 %v466, %v462
    %v651 = vpack.c.b16 %v467, %v463
    %v652 = vpack.c.b16 %v468, %v464
    %v653 = vpack.c.b16 %v473, %v469
    %v654 = vpack.c.b16 %v474, %v470
    %v655 = vpack.c.b16 %v475, %v471
    %v656 = vpack.c.b16 %v476, %v472
    %v657 = vpack.c.b16 %v481, %v477
    %v658 = vpack.c.b16 %v482, %v478
    %v659 = vpack.c.b16 %v483, %v479
    %v660 = vpack.c.b16 %v484, %v480
    %v661 = vpack.c.b16 %v489, %v485
    %v662 = vpack.c.b16 %v490, %v486
    %v663 = vpack.c.b16 %v491, %v487
    %v664 = vpack.c.b16 %v492, %v488
    %v665 = vpack.c.b16 %v497, %v493
    %v666 = vpack.c.b16 %v498, %v494
    %v667 = vpack.c.b16 %v499, %v495
    %v668 = vpack.c.b16 %v500, %v496
    %v669 = vpack.c.b16 %v505, %v501
    %v670 = vpack.c.b16 %v506, %v502
    %v671 = vpack.c.b16 %v507, %v503
    %v672 = vpack.c.b16 %v508, %v504
    %v673 = vpack.c.b16 %v513, %v509
    %v674 = vpack.c.b16 %v514, %v510
    %v675 = vpack.c.b16 %v515, %v511
    %v676 = vpack.c.b16 %v516, %v512
    %v677 = vpack.c.b16 %v521, %v517
    %v678 = vpack.c.b16 %v522, %v518
    %v679 = vpack.c.b16 %v523, %v519
    %v680 = vpack.c.b16 %v524, %v520
    %v681 = vpack.c.b16 %v529, %v525
    %v682 = vpack.c.b16 %v530, %v526
    %v683 = vpack.c.b16 %v531, %v527
    %v684 = vpack.c.b16 %v532, %v528
    %v685 = vpack.c.b16 %v537, %v533
    %v686 = vpack.c.b16 %v538, %v534
    %v687 = vpack.c.b16 %v539, %v535
    %v688 = vpack.c.b16 %v540, %v536
    %v689 = vpack.c.b16 %v545, %v541
    %v690 = vpack.c.b16 %v546, %v542
    %v691 = vpack.c.b16 %v547, %v543
    %v692 = vpack.c.b16 %v548, %v544
    %v693 = vpack.c.b16 %v553, %v549
    %v694 = vpack.c.b16 %v554, %v550
    %v695 = vpack.c.b16 %v555, %v551
    %v696 = vpack.c.b16 %v556, %v552
    %v697 = vpack.c.b16 %v561, %v557
    %v698 = vpack.c.b16 %v562, %v558
    %v699 = vpack.c.b16 %v563, %v559
    %v700 = vpack.c.b16 %v564, %v560
    %v701 = vpack.c.b16 %v569, %v565
    %v702 = vpack.c.b16 %v570, %v566
    %v703 = vpack.c.b16 %v571, %v567
    %v704 = vpack.c.b16 %v572, %v568
    %v705 = vpack.c.b16 %v577, %v573
    %v706 = vpack.c.b16 %v578, %v574
    %v707 = vpack.c.b16 %v579, %v575
    %v708 = vpack.c.b16 %v580, %v576
    %v709 = vpack.c.b16 %v585, %v581
    %v710 = vpack.c.b16 %v586, %v582
    %v711 = vpack.c.b16 %v587, %v583
    %v712 = vpack.c.b16 %v588, %v584
    %vm837 = vcmask 916480
    %v839 = vsel %vm837, %v213, 0
    %841 = vmatprep.subr.bf16.mxu0 %v590
    %842 = vmatpush1.bf16.msra.mxu0 %v589
    %843 = vmatprep.subr.bf16.mxu0 %v594
    %844 = vmatpush1.bf16.msra.mxu0 %v593
    %845 = vmatprep.subr.bf16.mxu0 %v598
    %846 = vmatpush1.bf16.msra.mxu0 %v597
    %847 = vmatprep.subr.bf16.mxu0 %v602
    %848 = vmatpush1.bf16.msra.mxu0 %v601
    %849 = vmatprep.subr.bf16.mxu0 %v606
    %850 = vmatpush1.bf16.msra.mxu0 %v605
    %851 = vmatprep.subr.bf16.mxu0 %v610
    %852 = vmatpush1.bf16.msra.mxu0 %v609
    %853 = vmatprep.subr.bf16.mxu0 %v614
    %854 = vmatpush1.bf16.msra.mxu0 %v613
    %855 = vmatprep.subr.bf16.mxu0 %v618
    %856 = vmatpush1.bf16.msra.mxu0 %v617
    %857 = vmatprep.subr.bf16.mxu0 %v622
    %858 = vmatpush1.bf16.msra.mxu0 %v621
    %859 = vmatprep.subr.bf16.mxu0 %v626
    %860 = vmatpush1.bf16.msra.mxu0 %v625
    %861 = vmatprep.subr.bf16.mxu0 %v630
    %862 = vmatpush1.bf16.msra.mxu0 %v629
    %863 = vmatprep.subr.bf16.mxu0 %v634
    %864 = vmatpush1.bf16.msra.mxu0 %v633
    %865 = vmatprep.subr.bf16.mxu0 %v638
    %866 = vmatpush1.bf16.msra.mxu0 %v637
    %867 = vmatprep.subr.bf16.mxu0 %v642
    %868 = vmatpush1.bf16.msra.mxu0 %v641
    %869 = vmatprep.subr.bf16.mxu0 %v646
    %870 = vmatpush1.bf16.msra.mxu0 %v645
    %871 = vmatprep.subr.bf16.mxu0 %v650
    %872 = vmatpush1.bf16.msra.mxu0 %v649
    %873 = vmatprep.mubr.bf16.mxu0 %v211
    %874 = vmatmul.mubr.bf16.gmra.mrb[0].mxu0 %v210
    %v875 = vpop.f32.mrb[0].mxu0
    %v876 = vadd.f32 %v190, %v875
    %v877 = vpop.f32.mrb[0].mxu0
    %v878 = vadd.f32 %v191, %v877
    %v879 = vpop.f32.mrb[0].mxu0
    %v880 = vadd.f32 %v194, %v879
    %v881 = vpop.f32.mrb[0].mxu0
    %v882 = vadd.f32 %v195, %v881
    %883 = vdwg.mxu0
    %884 = vmatprep.subr.bf16.mxu0 %v654
    %885 = vmatpush1.bf16.msra.mxu0 %v653
    %886 = vmatprep.subr.bf16.mxu0 %v658
    %887 = vmatpush1.bf16.msra.mxu0 %v657
    %888 = vmatprep.subr.bf16.mxu0 %v662
    %889 = vmatpush1.bf16.msra.mxu0 %v661
    %890 = vmatprep.subr.bf16.mxu0 %v666
    %891 = vmatpush1.bf16.msra.mxu0 %v665
    %892 = vmatprep.subr.bf16.mxu0 %v670
    %893 = vmatpush1.bf16.msra.mxu0 %v669
    %894 = vmatprep.subr.bf16.mxu0 %v674
    %895 = vmatpush1.bf16.msra.mxu0 %v673
    %896 = vmatprep.subr.bf16.mxu0 %v678
    %897 = vmatpush1.bf16.msra.mxu0 %v677
    %898 = vmatprep.subr.bf16.mxu0 %v682
    %899 = vmatpush1.bf16.msra.mxu0 %v681
    %900 = vmatprep.subr.bf16.mxu0 %v686
    %901 = vmatpush1.bf16.msra.mxu0 %v685
    %902 = vmatprep.subr.bf16.mxu0 %v690
    %903 = vmatpush1.bf16.msra.mxu0 %v689
    %904 = vmatprep.subr.bf16.mxu0 %v694
    %905 = vmatpush1.bf16.msra.mxu0 %v693
    %906 = vmatprep.subr.bf16.mxu0 %v698
    %907 = vmatpush1.bf16.msra.mxu0 %v697
    %908 = vmatprep.subr.bf16.mxu0 %v702
    %909 = vmatpush1.bf16.msra.mxu0 %v701
    %910 = vmatprep.subr.bf16.mxu0 %v706
    %911 = vmatpush1.bf16.msra.mxu0 %v705
    %912 = vmatprep.subr.bf16.mxu0 %v710
    %913 = vmatpush1.bf16.msra.mxu0 %v709
    %914 = vmatprep.subr.bf16.mxu0 0
    %915 = vmatpush1.bf16.msra.mxu0 0
    %916 = vmatprep.mubr.bf16.mxu0 %v839
    %917 = vmatmul.mubr.bf16.gmra.mrb[0].mxu0 %v212
    %v918 = vpop.f32.mrb[0].mxu0
    %v919 = vadd.f32 %v876, %v918
    %v920 = vpop.f32.mrb[0].mxu0
    %v921 = vadd.f32 %v878, %v920
    %v922 = vpop.f32.mrb[0].mxu0
    %v923 = vadd.f32 %v880, %v922
    %v924 = vpop.f32.mrb[0].mxu0
    %v925 = vadd.f32 %v882, %v924
    %926 = vdwg.mxu0
    %927 = vmatprep.subr.bf16.mxu0 %v592
    %928 = vmatpush1.bf16.msra.mxu0 %v591
    %929 = vmatprep.subr.bf16.mxu0 %v596
    %930 = vmatpush1.bf16.msra.mxu0 %v595
    %931 = vmatprep.subr.bf16.mxu0 %v600
    %932 = vmatpush1.bf16.msra.mxu0 %v599
    %933 = vmatprep.subr.bf16.mxu0 %v604
    %934 = vmatpush1.bf16.msra.mxu0 %v603
    %935 = vmatprep.subr.bf16.mxu0 %v608
    %936 = vmatpush1.bf16.msra.mxu0 %v607
    %937 = vmatprep.subr.bf16.mxu0 %v612
    %938 = vmatpush1.bf16.msra.mxu0 %v611
    %939 = vmatprep.subr.bf16.mxu0 %v616
    %940 = vmatpush1.bf16.msra.mxu0 %v615
    %941 = vmatprep.subr.bf16.mxu0 %v620
    %942 = vmatpush1.bf16.msra.mxu0 %v619
    %943 = vmatprep.subr.bf16.mxu0 %v624
    %944 = vmatpush1.bf16.msra.mxu0 %v623
    %945 = vmatprep.subr.bf16.mxu0 %v628
    %946 = vmatpush1.bf16.msra.mxu0 %v627
    %947 = vmatprep.subr.bf16.mxu0 %v632
    %948 = vmatpush1.bf16.msra.mxu0 %v631
    %949 = vmatprep.subr.bf16.mxu0 %v636
    %950 = vmatpush1.bf16.msra.mxu0 %v635
    %951 = vmatprep.subr.bf16.mxu0 %v640
    %952 = vmatpush1.bf16.msra.mxu0 %v639
    %953 = vmatprep.subr.bf16.mxu0 %v644
    %954 = vmatpush1.bf16.msra.mxu0 %v643
    %955 = vmatprep.subr.bf16.mxu0 %v648
    %956 = vmatpush1.bf16.msra.mxu0 %v647
    %957 = vmatprep.subr.bf16.mxu0 %v652
    %958 = vmatpush1.bf16.msra.mxu0 %v651
    %959 = vmatprep.mubr.bf16.mxu0 %v211
    %960 = vmatmul.mubr.bf16.gmra.mrb[0].mxu0 %v210
    %v961 = vpop.f32.mrb[0].mxu0
    %v962 = vadd.f32 %v192, %v961
    %v963 = vpop.f32.mrb[0].mxu0
    %v964 = vadd.f32 %v193, %v963
    %v965 = vpop.f32.mrb[0].mxu0
    %v966 = vadd.f32 %v196, %v965
    %v967 = vpop.f32.mrb[0].mxu0
    %v968 = vadd.f32 %v197, %v967
    %969 = vdwg.mxu0
    %970 = vmatprep.subr.bf16.mxu0 %v656
    %971 = vmatpush1.bf16.msra.mxu0 %v655
    %972 = vmatprep.subr.bf16.mxu0 %v660
    %973 = vmatpush1.bf16.msra.mxu0 %v659
    %974 = vmatprep.subr.bf16.mxu0 %v664
    %975 = vmatpush1.bf16.msra.mxu0 %v663
    %976 = vmatprep.subr.bf16.mxu0 %v668
    %977 = vmatpush1.bf16.msra.mxu0 %v667
    %978 = vmatprep.subr.bf16.mxu0 %v672
    %979 = vmatpush1.bf16.msra.mxu0 %v671
    %980 = vmatprep.subr.bf16.mxu0 %v676
    %981 = vmatpush1.bf16.msra.mxu0 %v675
    %982 = vmatprep.subr.bf16.mxu0 %v680
    %983 = vmatpush1.bf16.msra.mxu0 %v679
    %984 = vmatprep.subr.bf16.mxu0 %v684
    %985 = vmatpush1.bf16.msra.mxu0 %v683
    %986 = vmatprep.subr.bf16.mxu0 %v688
    %987 = vmatpush1.bf16.msra.mxu0 %v687
    %988 = vmatprep.subr.bf16.mxu0 %v692
    %989 = vmatpush1.bf16.msra.mxu0 %v691
    %990 = vmatprep.subr.bf16.mxu0 %v696
    %991 = vmatpush1.bf16.msra.mxu0 %v695
    %992 = vmatprep.subr.bf16.mxu0 %v700
    %993 = vmatpush1.bf16.msra.mxu0 %v699
    %994 = vmatprep.subr.bf16.mxu0 %v704
    %995 = vmatpush1.bf16.msra.mxu0 %v703
    %996 = vmatprep.subr.bf16.mxu0 %v708
    %997 = vmatpush1.bf16.msra.mxu0 %v707
    %998 = vmatprep.subr.bf16.mxu0 %v712
    %999 = vmatpush1.bf16.msra.mxu0 %v711
    %1000 = vmatprep.subr.bf16.mxu0 0
    %1001 = vmatpush1.bf16.msra.mxu0 0
    %1002 = vmatprep.mubr.bf16.mxu0 %v839
    %1003 = vmatmul.mubr.bf16.gmra.mrb[0].mxu0 %v212
    %v1004 = vpop.f32.mrb[0].mxu0
    %v1005 = vadd.f32 %v962, %v1004
    %v1006 = vpop.f32.mrb[0].mxu0
    %v1007 = vadd.f32 %v964, %v1006
    %v1008 = vpop.f32.mrb[0].mxu0
    %v1009 = vadd.f32 %v966, %v1008
    %v1010 = vpop.f32.mrb[0].mxu0
    %v1011 = vadd.f32 %v968, %v1010
    %1012 = vdwg.mxu0
    %s1013 = scalar_lea.vmem %s3, 1
    %v1014 = vld [vmem:[%s1013] ss:$2 sm:$0xf]
    %1015 = vset.pattern.permute.xlu0 1
    %1016 = vperm.xlu0 %1015, %v156
    %v1017 = vpop.permute.xlu0 %1016
    %1019 = vset.pattern.permute.xlu0 1
    %1020 = vperm.xlu0 %1019, %v157
    %v1021 = vpop.permute.xlu0 %1020
    %v1024 = vlaneseq
    %v1025 = vshrl.u32 %v1024, 7
    %v1026 = vsub.s32 0, %v1025
    %v1027 = vrot.slane %v1014, %v1026
    %v1028 = vlaneseq
    %v1029 = vshrl.u32 %v1028, 7
    %v1030 = vsub.s32 1, %v1029
    %v1031 = vrot.slane %v1014, %v1030
    %v1032 = vlaneseq
    %v1033 = vshrl.u32 %v1032, 7
    %v1034 = vsub.s32 2, %v1033
    %v1035 = vrot.slane %v1014, %v1034
    %v1036 = vlaneseq
    %v1037 = vshrl.u32 %v1036, 7
    %v1038 = vsub.s32 3, %v1037
    %v1039 = vrot.slane %v1014, %v1038
    %v1044 = vmul.f32 %v1017, %v1027
    %v1045 = vmul.f32 %v1017, %v1031
    %v1046 = vmul.f32 %v1017, %v1035
    %v1047 = vmul.f32 %v1017, %v1039
    %v1048 = vmul.f32 %v1021, %v1027
    %v1049 = vmul.f32 %v1021, %v1031
    %v1050 = vmul.f32 %v1021, %v1035
    %v1051 = vmul.f32 %v1021, %v1039
    %v1052 = vadd.f32 %v919, %v1044
    %v1053 = vadd.f32 %v921, %v1045
    %v1054 = vadd.f32 %v1005, %v1046
    %v1055 = vadd.f32 %v1007, %v1047
    %v1056 = vadd.f32 %v923, %v1048
    %v1057 = vadd.f32 %v925, %v1049
    %v1058 = vadd.f32 %v1009, %v1050
    %v1059 = vadd.f32 %v1011, %v1051
    %v1060 = vld [vmem:[%s4] sm:$0xf]
    %v1062 = vlaneseq
    %v1063 = vshrl.u32 %v1062, 7
    %v1064 = vsub.s32 0, %v1063
    %v1065 = vrot.slane %v1060, %v1064
    %v1066 = vlaneseq
    %v1067 = vshrl.u32 %v1066, 7
    %v1068 = vsub.s32 1, %v1067
    %v1069 = vrot.slane %v1060, %v1068
    %v1070 = vlaneseq
    %v1071 = vshrl.u32 %v1070, 7
    %v1072 = vsub.s32 2, %v1071
    %v1073 = vrot.slane %v1060, %v1072
    %v1074 = vlaneseq
    %v1075 = vshrl.u32 %v1074, 7
    %v1076 = vsub.s32 3, %v1075
    %v1077 = vrot.slane %v1060, %v1076
    %v1082 = vadd.f32 %v1052, %v1065
    %v1083 = vadd.f32 %v1053, %v1069
    %v1084 = vadd.f32 %v1054, %v1073
    %v1085 = vadd.f32 %v1055, %v1077
    %v1086 = vadd.f32 %v1056, %v1065
    %v1087 = vadd.f32 %v1057, %v1069
    %v1088 = vadd.f32 %v1058, %v1073
    %v1089 = vadd.f32 %v1059, %v1077
    %v1090 = vmul.f32 %v1082, 0.01
    %v1091 = vmul.f32 %v1083, 0.01
    %v1092 = vmul.f32 %v1084, 0.01
    %v1093 = vmul.f32 %v1085, 0.01
    %v1094 = vmul.f32 %v1086, 0.01
    %v1095 = vmul.f32 %v1087, 0.01
    %v1096 = vmul.f32 %v1088, 0.01
    %v1097 = vmul.f32 %v1089, 0.01
    %v1098 = vmax.f32 %v1082, %v1090
    %v1099 = vmax.f32 %v1083, %v1091
    %v1100 = vmax.f32 %v1084, %v1092
    %v1101 = vmax.f32 %v1085, %v1093
    %v1102 = vmax.f32 %v1086, %v1094
    %v1103 = vmax.f32 %v1087, %v1095
    %v1104 = vmax.f32 %v1088, %v1096
    %v1105 = vmax.f32 %v1089, %v1097
    %v1106 = vpack.c.bf16 %v1102, %v1098
    %v1107 = vpack.c.bf16 %v1103, %v1099
    %v1108 = vpack.c.bf16 %v1104, %v1100
    %v1109 = vpack.c.bf16 %v1105, %v1101
    %v1110 = vld [vmem:[%s5] sm:$0xff]
    %v1111 = vld [vmem:[%s5 + $0x8] sm:$0xff]
    %v1112 = vld [vmem:[%s5 + $0x10] sm:$0xff]
    %v1113 = vld [vmem:[%s5 + $0x18] sm:$0xff]
    %v1114 = vld [vmem:[%s5 + $0x20] sm:$0xff]
    %v1115 = vld [vmem:[%s5 + $0x28] sm:$0xff]
    %v1116 = vld [vmem:[%s5 + $0x30] sm:$0xff]
    %v1117 = vld [vmem:[%s5 + $0x38] sm:$0xff]
    %v1118 = vld [vmem:[%s5 + $0x40] sm:$0xff]
    %v1119 = vld [vmem:[%s5 + $0x48] sm:$0xff]
    %v1120 = vld [vmem:[%s5 + $0x50] sm:$0xff]
    %v1121 = vld [vmem:[%s5 + $0x58] sm:$0xff]
    %v1122 = vld [vmem:[%s5 + $0x60] sm:$0xff]
    %v1123 = vld [vmem:[%s5 + $0x68] sm:$0xff]
    %v1124 = vld [vmem:[%s5 + $0x70] sm:$0xff]
    %v1125 = vld [vmem:[%s5 + $0x78] sm:$0xff]
    %v1126 = vld [vmem:[%s5 + $0x80] sm:$0xff]
    %v1127 = vld [vmem:[%s5 + $0x88] sm:$0xff]
    %v1128 = vld [vmem:[%s5 + $0x90] sm:$0xff]
    %v1129 = vld [vmem:[%s5 + $0x98] sm:$0xff]
    %v1130 = vld [vmem:[%s5 + $0xa0] sm:$0xff]
    %v1131 = vld [vmem:[%s5 + $0xa8] sm:$0xff]
    %v1132 = vld [vmem:[%s5 + $0xb0] sm:$0xff]
    %v1133 = vld [vmem:[%s5 + $0xb8] sm:$0xff]
    %v1134 = vld [vmem:[%s5 + $0xc0] sm:$0xff]
    %v1135 = vld [vmem:[%s5 + $0xc8] sm:$0xff]
    %v1136 = vld [vmem:[%s5 + $0xd0] sm:$0xff]
    %v1137 = vld [vmem:[%s5 + $0xd8] sm:$0xff]
    %v1138 = vld [vmem:[%s5 + $0xe0] sm:$0xff]
    %v1139 = vld [vmem:[%s5 + $0xe8] sm:$0xff]
    %v1140 = vld [vmem:[%s5 + $0xf0] sm:$0xff]
    %v1141 = vld [vmem:[%s5 + $0xf8] sm:$0xff]
    %v1142 = vld [vmem:[%s5 + $0x100] sm:$0xff]
    %v1143 = vld [vmem:[%s5 + $0x108] sm:$0xff]
    %v1144 = vld [vmem:[%s5 + $0x110] sm:$0xff]
    %v1145 = vld [vmem:[%s5 + $0x118] sm:$0xff]
    %v1146 = vld [vmem:[%s5 + $0x120] sm:$0xff]
    %v1147 = vld [vmem:[%s5 + $0x128] sm:$0xff]
    %v1148 = vld [vmem:[%s5 + $0x130] sm:$0xff]
    %v1149 = vld [vmem:[%s5 + $0x138] sm:$0xff]
    %v1150 = vld [vmem:[%s5 + $0x140] sm:$0xff]
    %v1151 = vld [vmem:[%s5 + $0x148] sm:$0xff]
    %v1152 = vld [vmem:[%s5 + $0x150] sm:$0xff]
    %v1153 = vld [vmem:[%s5 + $0x158] sm:$0xff]
    %v1154 = vld [vmem:[%s5 + $0x160] sm:$0xff]
    %v1155 = vld [vmem:[%s5 + $0x168] sm:$0xff]
    %v1156 = vld [vmem:[%s5 + $0x170] sm:$0xff]
    %v1157 = vld [vmem:[%s5 + $0x178] sm:$0xff]
    %v1158 = vld [vmem:[%s5 + $0x180] sm:$0xff]
    %v1159 = vld [vmem:[%s5 + $0x188] sm:$0xff]
    %v1160 = vld [vmem:[%s5 + $0x190] sm:$0xff]
    %v1161 = vld [vmem:[%s5 + $0x198] sm:$0xff]
    %v1162 = vld [vmem:[%s5 + $0x1a0] sm:$0xff]
    %v1163 = vld [vmem:[%s5 + $0x1a8] sm:$0xff]
    %v1164 = vld [vmem:[%s5 + $0x1b0] sm:$0xff]
    %v1165 = vld [vmem:[%s5 + $0x1b8] sm:$0xff]
    %v1166 = vld [vmem:[%s5 + $0x1c0] sm:$0xff]
    %v1167 = vld [vmem:[%s5 + $0x1c8] sm:$0xff]
    %v1168 = vld [vmem:[%s5 + $0x1d0] sm:$0xff]
    %v1169 = vld [vmem:[%s5 + $0x1d8] sm:$0xff]
    %v1170 = vld [vmem:[%s5 + $0x1e0] sm:$0xff]
    %v1171 = vld [vmem:[%s5 + $0x1e8] sm:$0xff]
    %v1172 = vld [vmem:[%s5 + $0x1f0] sm:$0xff]
    %v1173 = vld [vmem:[%s5 + $0x1f8] sm:$0xff]
    %v1174 = vld [vmem:[%s5 + $0x200] sm:$0xff]
    %v1175 = vld [vmem:[%s5 + $0x208] sm:$0xff]
    %v1176 = vld [vmem:[%s5 + $0x210] sm:$0xff]
    %v1177 = vld [vmem:[%s5 + $0x218] sm:$0xff]
    %v1178 = vld [vmem:[%s5 + $0x220] sm:$0xff]
    %v1179 = vld [vmem:[%s5 + $0x228] sm:$0xff]
    %v1180 = vld [vmem:[%s5 + $0x230] sm:$0xff]
    %v1181 = vld [vmem:[%s5 + $0x238] sm:$0xff]
    %v1182 = vld [vmem:[%s5 + $0x240] sm:$0xff]
    %v1183 = vld [vmem:[%s5 + $0x248] sm:$0xff]
    %v1184 = vld [vmem:[%s5 + $0x250] sm:$0xff]
    %v1185 = vld [vmem:[%s5 + $0x258] sm:$0xff]
    %v1186 = vld [vmem:[%s5 + $0x260] sm:$0xff]
    %v1187 = vld [vmem:[%s5 + $0x268] sm:$0xff]
    %v1188 = vld [vmem:[%s5 + $0x270] sm:$0xff]
    %v1189 = vld [vmem:[%s5 + $0x278] sm:$0xff]
    %v1190 = vld [vmem:[%s5 + $0x280] sm:$0xff]
    %v1191 = vld [vmem:[%s5 + $0x288] sm:$0xff]
    %v1192 = vld [vmem:[%s5 + $0x290] sm:$0xff]
    %v1193 = vld [vmem:[%s5 + $0x298] sm:$0xff]
    %v1194 = vld [vmem:[%s5 + $0x2a0] sm:$0xff]
    %v1195 = vld [vmem:[%s5 + $0x2a8] sm:$0xff]
    %v1196 = vld [vmem:[%s5 + $0x2b0] sm:$0xff]
    %v1197 = vld [vmem:[%s5 + $0x2b8] sm:$0xff]
    %v1198 = vld [vmem:[%s5 + $0x2c0] sm:$0xff]
    %v1199 = vld [vmem:[%s5 + $0x2c8] sm:$0xff]
    %v1200 = vld [vmem:[%s5 + $0x2d0] sm:$0xff]
    %v1201 = vld [vmem:[%s5 + $0x2d8] sm:$0xff]
    %v1202 = vld [vmem:[%s5 + $0x2e0] sm:$0xff]
    %v1203 = vld [vmem:[%s5 + $0x2e8] sm:$0xff]
    %v1204 = vld [vmem:[%s5 + $0x2f0] sm:$0xff]
    %v1205 = vld [vmem:[%s5 + $0x2f8] sm:$0xff]
    %v1206 = vld [vmem:[%s5 + $0x300] sm:$0xff]
    %v1207 = vld [vmem:[%s5 + $0x308] sm:$0xff]
    %v1208 = vld [vmem:[%s5 + $0x310] sm:$0xff]
    %v1209 = vld [vmem:[%s5 + $0x318] sm:$0xff]
    %v1210 = vld [vmem:[%s5 + $0x320] sm:$0xff]
    %v1211 = vld [vmem:[%s5 + $0x328] sm:$0xff]
    %v1212 = vld [vmem:[%s5 + $0x330] sm:$0xff]
    %v1213 = vld [vmem:[%s5 + $0x338] sm:$0xff]
    %v1214 = vld [vmem:[%s5 + $0x340] sm:$0xff]
    %v1215 = vld [vmem:[%s5 + $0x348] sm:$0xff]
    %v1216 = vld [vmem:[%s5 + $0x350] sm:$0xff]
    %v1217 = vld [vmem:[%s5 + $0x358] sm:$0xff]
    %v1218 = vld [vmem:[%s5 + $0x360] sm:$0xff]
    %v1219 = vld [vmem:[%s5 + $0x368] sm:$0xff]
    %v1220 = vld [vmem:[%s5 + $0x370] sm:$0xff]
    %v1221 = vld [vmem:[%s5 + $0x378] sm:$0xff]
    %v1222 = vld [vmem:[%s5 + $0x380] sm:$0xff]
    %v1223 = vld [vmem:[%s5 + $0x388] sm:$0xff]
    %v1224 = vld [vmem:[%s5 + $0x390] sm:$0xff]
    %v1225 = vld [vmem:[%s5 + $0x398] sm:$0xff]
    %v1226 = vld [vmem:[%s5 + $0x3a0] sm:$0xff]
    %v1227 = vld [vmem:[%s5 + $0x3a8] sm:$0xff]
    %v1228 = vld [vmem:[%s5 + $0x3b0] sm:$0xff]
    %v1229 = vld [vmem:[%s5 + $0x3b8] sm:$0xff]
    %v1230 = vld [vmem:[%s5 + $0x3c0] sm:$0xff]
    %v1231 = vld [vmem:[%s5 + $0x3c8] sm:$0xff]
    %v1232 = vld [vmem:[%s5 + $0x3d0] sm:$0xff]
    %v1233 = vld [vmem:[%s5 + $0x3d8] sm:$0xff]
    %v1234 = vld [vmem:[%s5 + $0x3e0] sm:$0xff]
    %v1235 = vld [vmem:[%s5 + $0x3e8] sm:$0xff]
    %v1236 = vld [vmem:[%s5 + $0x3f0] sm:$0xff]
    %v1237 = vld [vmem:[%s5 + $0x3f8] sm:$0xff]
    %v1238 = vld [vmem:[%s6] sm:$0xf]
    %v1240 = vlaneseq
    %v1241 = vshrl.u32 %v1240, 7
    %v1242 = vsub.s32 0, %v1241
    %v1243 = vrot.slane %v1238, %v1242
    %v1244 = vlaneseq
    %v1245 = vshrl.u32 %v1244, 7
    %v1246 = vsub.s32 1, %v1245
    %v1247 = vrot.slane %v1238, %v1246
    %v1248 = vlaneseq
    %v1249 = vshrl.u32 %v1248, 7
    %v1250 = vsub.s32 2, %v1249
    %v1251 = vrot.slane %v1238, %v1250
    %v1252 = vlaneseq
    %v1253 = vshrl.u32 %v1252, 7
    %v1254 = vsub.s32 3, %v1253
    %v1255 = vrot.slane %v1238, %v1254
    %v1388 = vunpack.c.l.b16 %v1110
    %v1389 = vunpack.c.h.b16 %v1110
    %v1390 = vunpack.c.l.b16 %v1111
    %v1391 = vunpack.c.h.b16 %v1111
    %v1392 = vunpack.c.l.b16 %v1112
    %v1393 = vunpack.c.h.b16 %v1112
    %v1394 = vunpack.c.l.b16 %v1113
    %v1395 = vunpack.c.h.b16 %v1113
    %v1396 = vunpack.c.l.b16 %v1114
    %v1397 = vunpack.c.h.b16 %v1114
    %v1398 = vunpack.c.l.b16 %v1115
    %v1399 = vunpack.c.h.b16 %v1115
    %v1400 = vunpack.c.l.b16 %v1116
    %v1401 = vunpack.c.h.b16 %v1116
    %v1402 = vunpack.c.l.b16 %v1117
    %v1403 = vunpack.c.h.b16 %v1117
    %v1404 = vunpack.c.l.b16 %v1118
    %v1405 = vunpack.c.h.b16 %v1118
    %v1406 = vunpack.c.l.b16 %v1119
    %v1407 = vunpack.c.h.b16 %v1119
    %v1408 = vunpack.c.l.b16 %v1120
    %v1409 = vunpack.c.h.b16 %v1120
    %v1410 = vunpack.c.l.b16 %v1121
    %v1411 = vunpack.c.h.b16 %v1121
    %v1412 = vunpack.c.l.b16 %v1122
    %v1413 = vunpack.c.h.b16 %v1122
    %v1414 = vunpack.c.l.b16 %v1123
    %v1415 = vunpack.c.h.b16 %v1123
    %v1416 = vunpack.c.l.b16 %v1124
    %v1417 = vunpack.c.h.b16 %v1124
    %v1418 = vunpack.c.l.b16 %v1125
    %v1419 = vunpack.c.h.b16 %v1125
    %v1420 = vunpack.c.l.b16 %v1126
    %v1421 = vunpack.c.h.b16 %v1126
    %v1422 = vunpack.c.l.b16 %v1127
    %v1423 = vunpack.c.h.b16 %v1127
    %v1424 = vunpack.c.l.b16 %v1128
    %v1425 = vunpack.c.h.b16 %v1128
    %v1426 = vunpack.c.l.b16 %v1129
    %v1427 = vunpack.c.h.b16 %v1129
    %v1428 = vunpack.c.l.b16 %v1130
    %v1429 = vunpack.c.h.b16 %v1130
    %v1430 = vunpack.c.l.b16 %v1131
    %v1431 = vunpack.c.h.b16 %v1131
    %v1432 = vunpack.c.l.b16 %v1132
    %v1433 = vunpack.c.h.b16 %v1132
    %v1434 = vunpack.c.l.b16 %v1133
    %v1435 = vunpack.c.h.b16 %v1133
    %v1436 = vunpack.c.l.b16 %v1134
    %v1437 = vunpack.c.h.b16 %v1134
    %v1438 = vunpack.c.l.b16 %v1135
    %v1439 = vunpack.c.h.b16 %v1135
    %v1440 = vunpack.c.l.b16 %v1136
    %v1441 = vunpack.c.h.b16 %v1136
    %v1442 = vunpack.c.l.b16 %v1137
    %v1443 = vunpack.c.h.b16 %v1137
    %v1444 = vunpack.c.l.b16 %v1138
    %v1445 = vunpack.c.h.b16 %v1138
    %v1446 = vunpack.c.l.b16 %v1139
    %v1447 = vunpack.c.h.b16 %v1139
    %v1448 = vunpack.c.l.b16 %v1140
    %v1449 = vunpack.c.h.b16 %v1140
    %v1450 = vunpack.c.l.b16 %v1141
    %v1451 = vunpack.c.h.b16 %v1141
    %v1452 = vunpack.c.l.b16 %v1142
    %v1453 = vunpack.c.h.b16 %v1142
    %v1454 = vunpack.c.l.b16 %v1143
    %v1455 = vunpack.c.h.b16 %v1143
    %v1456 = vunpack.c.l.b16 %v1144
    %v1457 = vunpack.c.h.b16 %v1144
    %v1458 = vunpack.c.l.b16 %v1145
    %v1459 = vunpack.c.h.b16 %v1145
    %v1460 = vunpack.c.l.b16 %v1146
    %v1461 = vunpack.c.h.b16 %v1146
    %v1462 = vunpack.c.l.b16 %v1147
    %v1463 = vunpack.c.h.b16 %v1147
    %v1464 = vunpack.c.l.b16 %v1148
    %v1465 = vunpack.c.h.b16 %v1148
    %v1466 = vunpack.c.l.b16 %v1149
    %v1467 = vunpack.c.h.b16 %v1149
    %v1468 = vunpack.c.l.b16 %v1150
    %v1469 = vunpack.c.h.b16 %v1150
    %v1470 = vunpack.c.l.b16 %v1151
    %v1471 = vunpack.c.h.b16 %v1151
    %v1472 = vunpack.c.l.b16 %v1152
    %v1473 = vunpack.c.h.b16 %v1152
    %v1474 = vunpack.c.l.b16 %v1153
    %v1475 = vunpack.c.h.b16 %v1153
    %v1476 = vunpack.c.l.b16 %v1154
    %v1477 = vunpack.c.h.b16 %v1154
    %v1478 = vunpack.c.l.b16 %v1155
    %v1479 = vunpack.c.h.b16 %v1155
    %v1480 = vunpack.c.l.b16 %v1156
    %v1481 = vunpack.c.h.b16 %v1156
    %v1482 = vunpack.c.l.b16 %v1157
    %v1483 = vunpack.c.h.b16 %v1157
    %v1484 = vunpack.c.l.b16 %v1158
    %v1485 = vunpack.c.h.b16 %v1158
    %v1486 = vunpack.c.l.b16 %v1159
    %v1487 = vunpack.c.h.b16 %v1159
    %v1488 = vunpack.c.l.b16 %v1160
    %v1489 = vunpack.c.h.b16 %v1160
    %v1490 = vunpack.c.l.b16 %v1161
    %v1491 = vunpack.c.h.b16 %v1161
    %v1492 = vunpack.c.l.b16 %v1162
    %v1493 = vunpack.c.h.b16 %v1162
    %v1494 = vunpack.c.l.b16 %v1163
    %v1495 = vunpack.c.h.b16 %v1163
    %v1496 = vunpack.c.l.b16 %v1164
    %v1497 = vunpack.c.h.b16 %v1164
    %v1498 = vunpack.c.l.b16 %v1165
    %v1499 = vunpack.c.h.b16 %v1165
    %v1500 = vunpack.c.l.b16 %v1166
    %v1501 = vunpack.c.h.b16 %v1166
    %v1502 = vunpack.c.l.b16 %v1167
    %v1503 = vunpack.c.h.b16 %v1167
    %v1504 = vunpack.c.l.b16 %v1168
    %v1505 = vunpack.c.h.b16 %v1168
    %v1506 = vunpack.c.l.b16 %v1169
    %v1507 = vunpack.c.h.b16 %v1169
    %v1508 = vunpack.c.l.b16 %v1170
    %v1509 = vunpack.c.h.b16 %v1170
    %v1510 = vunpack.c.l.b16 %v1171
    %v1511 = vunpack.c.h.b16 %v1171
    %v1512 = vunpack.c.l.b16 %v1172
    %v1513 = vunpack.c.h.b16 %v1172
    %v1514 = vunpack.c.l.b16 %v1173
    %v1515 = vunpack.c.h.b16 %v1173
    %v1516 = vunpack.c.l.b16 %v1174
    %v1517 = vunpack.c.h.b16 %v1174
    %v1518 = vunpack.c.l.b16 %v1175
    %v1519 = vunpack.c.h.b16 %v1175
    %v1520 = vunpack.c.l.b16 %v1176
    %v1521 = vunpack.c.h.b16 %v1176
    %v1522 = vunpack.c.l.b16 %v1177
    %v1523 = vunpack.c.h.b16 %v1177
    %v1524 = vunpack.c.l.b16 %v1178
    %v1525 = vunpack.c.h.b16 %v1178
    %v1526 = vunpack.c.l.b16 %v1179
    %v1527 = vunpack.c.h.b16 %v1179
    %v1528 = vunpack.c.l.b16 %v1180
    %v1529 = vunpack.c.h.b16 %v1180
    %v1530 = vunpack.c.l.b16 %v1181
    %v1531 = vunpack.c.h.b16 %v1181
    %v1532 = vunpack.c.l.b16 %v1182
    %v1533 = vunpack.c.h.b16 %v1182
    %v1534 = vunpack.c.l.b16 %v1183
    %v1535 = vunpack.c.h.b16 %v1183
    %v1536 = vunpack.c.l.b16 %v1184
    %v1537 = vunpack.c.h.b16 %v1184
    %v1538 = vunpack.c.l.b16 %v1185
    %v1539 = vunpack.c.h.b16 %v1185
    %v1540 = vunpack.c.l.b16 %v1186
    %v1541 = vunpack.c.h.b16 %v1186
    %v1542 = vunpack.c.l.b16 %v1187
    %v1543 = vunpack.c.h.b16 %v1187
    %v1544 = vunpack.c.l.b16 %v1188
    %v1545 = vunpack.c.h.b16 %v1188
    %v1546 = vunpack.c.l.b16 %v1189
    %v1547 = vunpack.c.h.b16 %v1189
    %v1548 = vunpack.c.l.b16 %v1190
    %v1549 = vunpack.c.h.b16 %v1190
    %v1550 = vunpack.c.l.b16 %v1191
    %v1551 = vunpack.c.h.b16 %v1191
    %v1552 = vunpack.c.l.b16 %v1192
    %v1553 = vunpack.c.h.b16 %v1192
    %v1554 = vunpack.c.l.b16 %v1193
    %v1555 = vunpack.c.h.b16 %v1193
    %v1556 = vunpack.c.l.b16 %v1194
    %v1557 = vunpack.c.h.b16 %v1194
    %v1558 = vunpack.c.l.b16 %v1195
    %v1559 = vunpack.c.h.b16 %v1195
    %v1560 = vunpack.c.l.b16 %v1196
    %v1561 = vunpack.c.h.b16 %v1196
    %v1562 = vunpack.c.l.b16 %v1197
    %v1563 = vunpack.c.h.b16 %v1197
    %v1564 = vunpack.c.l.b16 %v1198
    %v1565 = vunpack.c.h.b16 %v1198
    %v1566 = vunpack.c.l.b16 %v1199
    %v1567 = vunpack.c.h.b16 %v1199
    %v1568 = vunpack.c.l.b16 %v1200
    %v1569 = vunpack.c.h.b16 %v1200
    %v1570 = vunpack.c.l.b16 %v1201
    %v1571 = vunpack.c.h.b16 %v1201
    %v1572 = vunpack.c.l.b16 %v1202
    %v1573 = vunpack.c.h.b16 %v1202
    %v1574 = vunpack.c.l.b16 %v1203
    %v1575 = vunpack.c.h.b16 %v1203
    %v1576 = vunpack.c.l.b16 %v1204
    %v1577 = vunpack.c.h.b16 %v1204
    %v1578 = vunpack.c.l.b16 %v1205
    %v1579 = vunpack.c.h.b16 %v1205
    %v1580 = vunpack.c.l.b16 %v1206
    %v1581 = vunpack.c.h.b16 %v1206
    %v1582 = vunpack.c.l.b16 %v1207
    %v1583 = vunpack.c.h.b16 %v1207
    %v1584 = vunpack.c.l.b16 %v1208
    %v1585 = vunpack.c.h.b16 %v1208
    %v1586 = vunpack.c.l.b16 %v1209
    %v1587 = vunpack.c.h.b16 %v1209
    %v1588 = vunpack.c.l.b16 %v1210
    %v1589 = vunpack.c.h.b16 %v1210
    %v1590 = vunpack.c.l.b16 %v1211
    %v1591 = vunpack.c.h.b16 %v1211
    %v1592 = vunpack.c.l.b16 %v1212
    %v1593 = vunpack.c.h.b16 %v1212
    %v1594 = vunpack.c.l.b16 %v1213
    %v1595 = vunpack.c.h.b16 %v1213
    %v1596 = vunpack.c.l.b16 %v1214
    %v1597 = vunpack.c.h.b16 %v1214
    %v1598 = vunpack.c.l.b16 %v1215
    %v1599 = vunpack.c.h.b16 %v1215
    %v1600 = vunpack.c.l.b16 %v1216
    %v1601 = vunpack.c.h.b16 %v1216
    %v1602 = vunpack.c.l.b16 %v1217
    %v1603 = vunpack.c.h.b16 %v1217
    %v1604 = vunpack.c.l.b16 %v1218
    %v1605 = vunpack.c.h.b16 %v1218
    %v1606 = vunpack.c.l.b16 %v1219
    %v1607 = vunpack.c.h.b16 %v1219
    %v1608 = vunpack.c.l.b16 %v1220
    %v1609 = vunpack.c.h.b16 %v1220
    %v1610 = vunpack.c.l.b16 %v1221
    %v1611 = vunpack.c.h.b16 %v1221
    %v1612 = vunpack.c.l.b16 %v1222
    %v1613 = vunpack.c.h.b16 %v1222
    %v1614 = vunpack.c.l.b16 %v1223
    %v1615 = vunpack.c.h.b16 %v1223
    %v1616 = vunpack.c.l.b16 %v1224
    %v1617 = vunpack.c.h.b16 %v1224
    %v1618 = vunpack.c.l.b16 %v1225
    %v1619 = vunpack.c.h.b16 %v1225
    %v1620 = vunpack.c.l.b16 %v1226
    %v1621 = vunpack.c.h.b16 %v1226
    %v1622 = vunpack.c.l.b16 %v1227
    %v1623 = vunpack.c.h.b16 %v1227
    %v1624 = vunpack.c.l.b16 %v1228
    %v1625 = vunpack.c.h.b16 %v1228
    %v1626 = vunpack.c.l.b16 %v1229
    %v1627 = vunpack.c.h.b16 %v1229
    %v1628 = vunpack.c.l.b16 %v1230
    %v1629 = vunpack.c.h.b16 %v1230
    %v1630 = vunpack.c.l.b16 %v1231
    %v1631 = vunpack.c.h.b16 %v1231
    %v1632 = vunpack.c.l.b16 %v1232
    %v1633 = vunpack.c.h.b16 %v1232
    %v1634 = vunpack.c.l.b16 %v1233
    %v1635 = vunpack.c.h.b16 %v1233
    %v1636 = vunpack.c.l.b16 %v1234
    %v1637 = vunpack.c.h.b16 %v1234
    %v1638 = vunpack.c.l.b16 %v1235
    %v1639 = vunpack.c.h.b16 %v1235
    %v1640 = vunpack.c.l.b16 %v1236
    %v1641 = vunpack.c.h.b16 %v1236
    %v1642 = vunpack.c.l.b16 %v1237
    %v1643 = vunpack.c.h.b16 %v1237
    %v1644 = vpack.c.b16 %v1392, %v1388
    %v1645 = vpack.c.b16 %v1393, %v1389
    %v1646 = vpack.c.b16 %v1394, %v1390
    %v1647 = vpack.c.b16 %v1395, %v1391
    %v1648 = vpack.c.b16 %v1400, %v1396
    %v1649 = vpack.c.b16 %v1401, %v1397
    %v1650 = vpack.c.b16 %v1402, %v1398
    %v1651 = vpack.c.b16 %v1403, %v1399
    %v1652 = vpack.c.b16 %v1408, %v1404
    %v1653 = vpack.c.b16 %v1409, %v1405
    %v1654 = vpack.c.b16 %v1410, %v1406
    %v1655 = vpack.c.b16 %v1411, %v1407
    %v1656 = vpack.c.b16 %v1416, %v1412
    %v1657 = vpack.c.b16 %v1417, %v1413
    %v1658 = vpack.c.b16 %v1418, %v1414
    %v1659 = vpack.c.b16 %v1419, %v1415
    %v1660 = vpack.c.b16 %v1424, %v1420
    %v1661 = vpack.c.b16 %v1425, %v1421
    %v1662 = vpack.c.b16 %v1426, %v1422
    %v1663 = vpack.c.b16 %v1427, %v1423
    %v1664 = vpack.c.b16 %v1432, %v1428
    %v1665 = vpack.c.b16 %v1433, %v1429
    %v1666 = vpack.c.b16 %v1434, %v1430
    %v1667 = vpack.c.b16 %v1435, %v1431
    %v1668 = vpack.c.b16 %v1440, %v1436
    %v1669 = vpack.c.b16 %v1441, %v1437
    %v1670 = vpack.c.b16 %v1442, %v1438
    %v1671 = vpack.c.b16 %v1443, %v1439
    %v1672 = vpack.c.b16 %v1448, %v1444
    %v1673 = vpack.c.b16 %v1449, %v1445
    %v1674 = vpack.c.b16 %v1450, %v1446
    %v1675 = vpack.c.b16 %v1451, %v1447
    %v1676 = vpack.c.b16 %v1456, %v1452
    %v1677 = vpack.c.b16 %v1457, %v1453
    %v1678 = vpack.c.b16 %v1458, %v1454
    %v1679 = vpack.c.b16 %v1459, %v1455
    %v1680 = vpack.c.b16 %v1464, %v1460
    %v1681 = vpack.c.b16 %v1465, %v1461
    %v1682 = vpack.c.b16 %v1466, %v1462
    %v1683 = vpack.c.b16 %v1467, %v1463
    %v1684 = vpack.c.b16 %v1472, %v1468
    %v1685 = vpack.c.b16 %v1473, %v1469
    %v1686 = vpack.c.b16 %v1474, %v1470
    %v1687 = vpack.c.b16 %v1475, %v1471
    %v1688 = vpack.c.b16 %v1480, %v1476
    %v1689 = vpack.c.b16 %v1481, %v1477
    %v1690 = vpack.c.b16 %v1482, %v1478
    %v1691 = vpack.c.b16 %v1483, %v1479
    %v1692 = vpack.c.b16 %v1488, %v1484
    %v1693 = vpack.c.b16 %v1489, %v1485
    %v1694 = vpack.c.b16 %v1490, %v1486
    %v1695 = vpack.c.b16 %v1491, %v1487
    %v1696 = vpack.c.b16 %v1496, %v1492
    %v1697 = vpack.c.b16 %v1497, %v1493
    %v1698 = vpack.c.b16 %v1498, %v1494
    %v1699 = vpack.c.b16 %v1499, %v1495
    %v1700 = vpack.c.b16 %v1504, %v1500
    %v1701 = vpack.c.b16 %v1505, %v1501
    %v1702 = vpack.c.b16 %v1506, %v1502
    %v1703 = vpack.c.b16 %v1507, %v1503
    %v1704 = vpack.c.b16 %v1512, %v1508
    %v1705 = vpack.c.b16 %v1513, %v1509
    %v1706 = vpack.c.b16 %v1514, %v1510
    %v1707 = vpack.c.b16 %v1515, %v1511
    %v1708 = vpack.c.b16 %v1520, %v1516
    %v1709 = vpack.c.b16 %v1521, %v1517
    %v1710 = vpack.c.b16 %v1522, %v1518
    %v1711 = vpack.c.b16 %v1523, %v1519
    %v1712 = vpack.c.b16 %v1528, %v1524
    %v1713 = vpack.c.b16 %v1529, %v1525
    %v1714 = vpack.c.b16 %v1530, %v1526
    %v1715 = vpack.c.b16 %v1531, %v1527
    %v1716 = vpack.c.b16 %v1536, %v1532
    %v1717 = vpack.c.b16 %v1537, %v1533
    %v1718 = vpack.c.b16 %v1538, %v1534
    %v1719 = vpack.c.b16 %v1539, %v1535
    %v1720 = vpack.c.b16 %v1544, %v1540
    %v1721 = vpack.c.b16 %v1545, %v1541
    %v1722 = vpack.c.b16 %v1546, %v1542
    %v1723 = vpack.c.b16 %v1547, %v1543
    %v1724 = vpack.c.b16 %v1552, %v1548
    %v1725 = vpack.c.b16 %v1553, %v1549
    %v1726 = vpack.c.b16 %v1554, %v1550
    %v1727 = vpack.c.b16 %v1555, %v1551
    %v1728 = vpack.c.b16 %v1560, %v1556
    %v1729 = vpack.c.b16 %v1561, %v1557
    %v1730 = vpack.c.b16 %v1562, %v1558
    %v1731 = vpack.c.b16 %v1563, %v1559
    %v1732 = vpack.c.b16 %v1568, %v1564
    %v1733 = vpack.c.b16 %v1569, %v1565
    %v1734 = vpack.c.b16 %v1570, %v1566
    %v1735 = vpack.c.b16 %v1571, %v1567
    %v1736 = vpack.c.b16 %v1576, %v1572
    %v1737 = vpack.c.b16 %v1577, %v1573
    %v1738 = vpack.c.b16 %v1578, %v1574
    %v1739 = vpack.c.b16 %v1579, %v1575
    %v1740 = vpack.c.b16 %v1584, %v1580
    %v1741 = vpack.c.b16 %v1585, %v1581
    %v1742 = vpack.c.b16 %v1586, %v1582
    %v1743 = vpack.c.b16 %v1587, %v1583
    %v1744 = vpack.c.b16 %v1592, %v1588
    %v1745 = vpack.c.b16 %v1593, %v1589
    %v1746 = vpack.c.b16 %v1594, %v1590
    %v1747 = vpack.c.b16 %v1595, %v1591
    %v1748 = vpack.c.b16 %v1600, %v1596
    %v1749 = vpack.c.b16 %v1601, %v1597
    %v1750 = vpack.c.b16 %v1602, %v1598
    %v1751 = vpack.c.b16 %v1603, %v1599
    %v1752 = vpack.c.b16 %v1608, %v1604
    %v1753 = vpack.c.b16 %v1609, %v1605
    %v1754 = vpack.c.b16 %v1610, %v1606
    %v1755 = vpack.c.b16 %v1611, %v1607
    %v1756 = vpack.c.b16 %v1616, %v1612
    %v1757 = vpack.c.b16 %v1617, %v1613
    %v1758 = vpack.c.b16 %v1618, %v1614
    %v1759 = vpack.c.b16 %v1619, %v1615
    %v1760 = vpack.c.b16 %v1624, %v1620
    %v1761 = vpack.c.b16 %v1625, %v1621
    %v1762 = vpack.c.b16 %v1626, %v1622
    %v1763 = vpack.c.b16 %v1627, %v1623
    %v1764 = vpack.c.b16 %v1632, %v1628
    %v1765 = vpack.c.b16 %v1633, %v1629
    %v1766 = vpack.c.b16 %v1634, %v1630
    %v1767 = vpack.c.b16 %v1635, %v1631
    %v1768 = vpack.c.b16 %v1640, %v1636
    %v1769 = vpack.c.b16 %v1641, %v1637
    %v1770 = vpack.c.b16 %v1642, %v1638
    %v1771 = vpack.c.b16 %v1643, %v1639
    %1900 = vmatprep.subr.bf16.mxu0 %v1645
    %1901 = vmatpush1.bf16.msra.mxu0 %v1644
    %1902 = vmatprep.subr.bf16.mxu0 %v1649
    %1903 = vmatpush1.bf16.msra.mxu0 %v1648
    %1904 = vmatprep.subr.bf16.mxu0 %v1653
    %1905 = vmatpush1.bf16.msra.mxu0 %v1652
    %1906 = vmatprep.subr.bf16.mxu0 %v1657
    %1907 = vmatpush1.bf16.msra.mxu0 %v1656
    %1908 = vmatprep.subr.bf16.mxu0 %v1661
    %1909 = vmatpush1.bf16.msra.mxu0 %v1660
    %1910 = vmatprep.subr.bf16.mxu0 %v1665
    %1911 = vmatpush1.bf16.msra.mxu0 %v1664
    %1912 = vmatprep.subr.bf16.mxu0 %v1669
    %1913 = vmatpush1.bf16.msra.mxu0 %v1668
    %1914 = vmatprep.subr.bf16.mxu0 %v1673
    %1915 = vmatpush1.bf16.msra.mxu0 %v1672
    %1916 = vmatprep.subr.bf16.mxu0 %v1677
    %1917 = vmatpush1.bf16.msra.mxu0 %v1676
    %1918 = vmatprep.subr.bf16.mxu0 %v1681
    %1919 = vmatpush1.bf16.msra.mxu0 %v1680
    %1920 = vmatprep.subr.bf16.mxu0 %v1685
    %1921 = vmatpush1.bf16.msra.mxu0 %v1684
    %1922 = vmatprep.subr.bf16.mxu0 %v1689
    %1923 = vmatpush1.bf16.msra.mxu0 %v1688
    %1924 = vmatprep.subr.bf16.mxu0 %v1693
    %1925 = vmatpush1.bf16.msra.mxu0 %v1692
    %1926 = vmatprep.subr.bf16.mxu0 %v1697
    %1927 = vmatpush1.bf16.msra.mxu0 %v1696
    %1928 = vmatprep.subr.bf16.mxu0 %v1701
    %1929 = vmatpush1.bf16.msra.mxu0 %v1700
    %1930 = vmatprep.subr.bf16.mxu0 %v1705
    %1931 = vmatpush1.bf16.msra.mxu0 %v1704
    %1932 = vmatprep.mubr.bf16.mxu0 %v1107
    %1933 = vmatmul.mubr.bf16.gmra.mrb[0].mxu0 %v1106
    %v1934 = vpop.f32.mrb[0].mxu0
    %v1935 = vadd.f32 %v1243, %v1934
    %v1936 = vpop.f32.mrb[0].mxu0
    %v1937 = vadd.f32 %v1247, %v1936
    %v1938 = vpop.f32.mrb[0].mxu0
    %v1939 = vadd.f32 %v1243, %v1938
    %v1940 = vpop.f32.mrb[0].mxu0
    %v1941 = vadd.f32 %v1247, %v1940
    %1942 = vdwg.mxu0
    %1943 = vmatprep.subr.bf16.mxu0 %v1709
    %1944 = vmatpush1.bf16.msra.mxu0 %v1708
    %1945 = vmatprep.subr.bf16.mxu0 %v1713
    %1946 = vmatpush1.bf16.msra.mxu0 %v1712
    %1947 = vmatprep.subr.bf16.mxu0 %v1717
    %1948 = vmatpush1.bf16.msra.mxu0 %v1716
    %1949 = vmatprep.subr.bf16.mxu0 %v1721
    %1950 = vmatpush1.bf16.msra.mxu0 %v1720
    %1951 = vmatprep.subr.bf16.mxu0 %v1725
    %1952 = vmatpush1.bf16.msra.mxu0 %v1724
    %1953 = vmatprep.subr.bf16.mxu0 %v1729
    %1954 = vmatpush1.bf16.msra.mxu0 %v1728
    %1955 = vmatprep.subr.bf16.mxu0 %v1733
    %1956 = vmatpush1.bf16.msra.mxu0 %v1732
    %1957 = vmatprep.subr.bf16.mxu0 %v1737
    %1958 = vmatpush1.bf16.msra.mxu0 %v1736
    %1959 = vmatprep.subr.bf16.mxu0 %v1741
    %1960 = vmatpush1.bf16.msra.mxu0 %v1740
    %1961 = vmatprep.subr.bf16.mxu0 %v1745
    %1962 = vmatpush1.bf16.msra.mxu0 %v1744
    %1963 = vmatprep.subr.bf16.mxu0 %v1749
    %1964 = vmatpush1.bf16.msra.mxu0 %v1748
    %1965 = vmatprep.subr.bf16.mxu0 %v1753
    %1966 = vmatpush1.bf16.msra.mxu0 %v1752
    %1967 = vmatprep.subr.bf16.mxu0 %v1757
    %1968 = vmatpush1.bf16.msra.mxu0 %v1756
    %1969 = vmatprep.subr.bf16.mxu0 %v1761
    %1970 = vmatpush1.bf16.msra.mxu0 %v1760
    %1971 = vmatprep.subr.bf16.mxu0 %v1765
    %1972 = vmatpush1.bf16.msra.mxu0 %v1764
    %1973 = vmatprep.subr.bf16.mxu0 %v1769
    %1974 = vmatpush1.bf16.msra.mxu0 %v1768
    %1975 = vmatprep.mubr.bf16.mxu0 %v1109
    %1976 = vmatmul.mubr.bf16.gmra.mrb[0].mxu0 %v1108
    %v1977 = vpop.f32.mrb[0].mxu0
    %v1978 = vadd.f32 %v1935, %v1977
    %v1979 = vpop.f32.mrb[0].mxu0
    %v1980 = vadd.f32 %v1937, %v1979
    %v1981 = vpop.f32.mrb[0].mxu0
    %v1982 = vadd.f32 %v1939, %v1981
    %v1983 = vpop.f32.mrb[0].mxu0
    %v1984 = vadd.f32 %v1941, %v1983
    %1985 = vdwg.mxu0
    %1986 = vmatprep.subr.bf16.mxu0 %v1647
    %1987 = vmatpush1.bf16.msra.mxu0 %v1646
    %1988 = vmatprep.subr.bf16.mxu0 %v1651
    %1989 = vmatpush1.bf16.msra.mxu0 %v1650
    %1990 = vmatprep.subr.bf16.mxu0 %v1655
    %1991 = vmatpush1.bf16.msra.mxu0 %v1654
    %1992 = vmatprep.subr.bf16.mxu0 %v1659
    %1993 = vmatpush1.bf16.msra.mxu0 %v1658
    %1994 = vmatprep.subr.bf16.mxu0 %v1663
    %1995 = vmatpush1.bf16.msra.mxu0 %v1662
    %1996 = vmatprep.subr.bf16.mxu0 %v1667
    %1997 = vmatpush1.bf16.msra.mxu0 %v1666
    %1998 = vmatprep.subr.bf16.mxu0 %v1671
    %1999 = vmatpush1.bf16.msra.mxu0 %v1670
    %2000 = vmatprep.subr.bf16.mxu0 %v1675
    %2001 = vmatpush1.bf16.msra.mxu0 %v1674
    %2002 = vmatprep.subr.bf16.mxu0 %v1679
    %2003 = vmatpush1.bf16.msra.mxu0 %v1678
    %2004 = vmatprep.subr.bf16.mxu0 %v1683
    %2005 = vmatpush1.bf16.msra.mxu0 %v1682
    %2006 = vmatprep.subr.bf16.mxu0 %v1687
    %2007 = vmatpush1.bf16.msra.mxu0 %v1686
    %2008 = vmatprep.subr.bf16.mxu0 %v1691
    %2009 = vmatpush1.bf16.msra.mxu0 %v1690
    %2010 = vmatprep.subr.bf16.mxu0 %v1695
    %2011 = vmatpush1.bf16.msra.mxu0 %v1694
    %2012 = vmatprep.subr.bf16.mxu0 %v1699
    %2013 = vmatpush1.bf16.msra.mxu0 %v1698
    %2014 = vmatprep.subr.bf16.mxu0 %v1703
    %2015 = vmatpush1.bf16.msra.mxu0 %v1702
    %2016 = vmatprep.subr.bf16.mxu0 %v1707
    %2017 = vmatpush1.bf16.msra.mxu0 %v1706
    %2018 = vmatprep.mubr.bf16.mxu0 %v1107
    %2019 = vmatmul.mubr.bf16.gmra.mrb[0].mxu0 %v1106
    %v2020 = vpop.f32.mrb[0].mxu0
    %v2021 = vadd.f32 %v1251, %v2020
    %v2022 = vpop.f32.mrb[0].mxu0
    %v2023 = vadd.f32 %v1255, %v2022
    %v2024 = vpop.f32.mrb[0].mxu0
    %v2025 = vadd.f32 %v1251, %v2024
    %v2026 = vpop.f32.mrb[0].mxu0
    %v2027 = vadd.f32 %v1255, %v2026
    %2028 = vdwg.mxu0
    %2029 = vmatprep.subr.bf16.mxu0 %v1711
    %2030 = vmatpush1.bf16.msra.mxu0 %v1710
    %2031 = vmatprep.subr.bf16.mxu0 %v1715
    %2032 = vmatpush1.bf16.msra.mxu0 %v1714
    %2033 = vmatprep.subr.bf16.mxu0 %v1719
    %2034 = vmatpush1.bf16.msra.mxu0 %v1718
    %2035 = vmatprep.subr.bf16.mxu0 %v1723
    %2036 = vmatpush1.bf16.msra.mxu0 %v1722
    %2037 = vmatprep.subr.bf16.mxu0 %v1727
    %2038 = vmatpush1.bf16.msra.mxu0 %v1726
    %2039 = vmatprep.subr.bf16.mxu0 %v1731
    %2040 = vmatpush1.bf16.msra.mxu0 %v1730
    %2041 = vmatprep.subr.bf16.mxu0 %v1735
    %2042 = vmatpush1.bf16.msra.mxu0 %v1734
    %2043 = vmatprep.subr.bf16.mxu0 %v1739
    %2044 = vmatpush1.bf16.msra.mxu0 %v1738
    %2045 = vmatprep.subr.bf16.mxu0 %v1743
    %2046 = vmatpush1.bf16.msra.mxu0 %v1742
    %2047 = vmatprep.subr.bf16.mxu0 %v1747
    %2048 = vmatpush1.bf16.msra.mxu0 %v1746
    %2049 = vmatprep.subr.bf16.mxu0 %v1751
    %2050 = vmatpush1.bf16.msra.mxu0 %v1750
    %2051 = vmatprep.subr.bf16.mxu0 %v1755
    %2052 = vmatpush1.bf16.msra.mxu0 %v1754
    %2053 = vmatprep.subr.bf16.mxu0 %v1759
    %2054 = vmatpush1.bf16.msra.mxu0 %v1758
    %2055 = vmatprep.subr.bf16.mxu0 %v1763
    %2056 = vmatpush1.bf16.msra.mxu0 %v1762
    %2057 = vmatprep.subr.bf16.mxu0 %v1767
    %2058 = vmatpush1.bf16.msra.mxu0 %v1766
    %2059 = vmatprep.subr.bf16.mxu0 %v1771
    %2060 = vmatpush1.bf16.msra.mxu0 %v1770
    %2061 = vmatprep.mubr.bf16.mxu0 %v1109
    %2062 = vmatmul.mubr.bf16.gmra.mrb[0].mxu0 %v1108
    %v2063 = vpop.f32.mrb[0].mxu0
    %v2064 = vadd.f32 %v2021, %v2063
    %v2065 = vpop.f32.mrb[0].mxu0
    %v2066 = vadd.f32 %v2023, %v2065
    %v2067 = vpop.f32.mrb[0].mxu0
    %v2068 = vadd.f32 %v2025, %v2067
    %v2069 = vpop.f32.mrb[0].mxu0
    %v2070 = vadd.f32 %v2027, %v2069
    %2071 = vdwg.mxu0
    %2072 = vst [vmem:[#allocation2] sm:$0xff] %v1978
    %2073 = vst [vmem:[#allocation2 + $0x8] sm:$0xff] %v1980
    %2074 = vst [vmem:[#allocation2 + $0x10] sm:$0xff] %v2064
    %2075 = vst.msk [vmem:[#allocation2 + $0x18] sm:$0xff] %vm837, %v2066
    %2076 = vst [vmem:[#allocation2 + $0x20] sm:$0xff] %v1982
    %2077 = vst [vmem:[#allocation2 + $0x28] sm:$0xff] %v1984
    %2078 = vst [vmem:[#allocation2 + $0x30] sm:$0xff] %v2068
    %2079 = vst.msk [vmem:[#allocation2 + $0x38] sm:$0xff] %vm837, %v2070
    // Predicated region
    $region30: #{tpu_custom_call.1} parent=1 // pred_check
      _
    $region31: #{tpu_custom_call.1} parent=1 // pred_check_branch
      %2081 = sbr.rel (0) target = $region33
    $region32: #{tpu_custom_call.1} parent=1 // pred_region
      %s2083 = ssub.s32 1024, 1024
      %2084 = vsyncadd [#allocation3], %s2083
      %s2085 = sshll.u32 [#allocation2], 4
      %s2086 = int_to_ptr.vmem [resolvable:$true] %s2085
      %2091 = dma.vmem_to_hbm [thread:$0]  %s2086, 1024, %s7, [#allocation3], 512, 512, 32
    $region33: #{tpu_custom_call.1} parent=1 // pred_fallthru
      _
    // Predicated region
    $region34: #{tpu_custom_call.1} parent=1 // pred_check
      _
    $region35: #{tpu_custom_call.1} parent=1 // pred_check_branch
      %2093 = sbr.rel (0) target = $region37
    $region36: #{tpu_custom_call.1} parent=1 // pred_region
      %2094 = dma.done [#allocation3], 1024
    $region37: #{tpu_custom_call.1} parent=1 // pred_fallthru
      _
    %2095 = vsyncpa [#allocation3], 1

</llo_original>
